<compile_context>
chip_gen: v6e
topology: v6e:2x2x1
jax: 0.10.0
libtpu: 0.0.40
codegen_flags: <defaults>
</compile_context>

<pallas_src>
import jax
import jax.numpy as jnp
from jax.experimental import pallas as pl
from jax.experimental.pallas import tpu as pltpu

# layer widths of the PyTorch MLP
HIDDEN = (512, 256, 128, 64, 32, 1)
LANE = 128
SUBLANE = 8
DEFAULT_TILE_B = 256  # safe for v5e/v6e/v7x default scoped VMEM limits


def _round_up(x, m):
    return ((x + m - 1) // m) * m


def mlp_kernel(x_ref,
               w1, b1, w2, b2, w3, b3, w4, b4, w5, b5, w6, b6,
               o_ref):
    h = x_ref[...]  # bf16 activations, padded lanes are zero
    # hidden layers: bf16 matmul on MXU (f32 accumulate) + f32 bias + ReLU (VPU)
    for w, b in ((w1, b1), (w2, b2), (w3, b3), (w4, b4), (w5, b5)):
        acc = jnp.dot(h, w[...], preferred_element_type=jnp.float32)
        acc = acc + b[...]
        h = jnp.maximum(acc, 0.0).astype(jnp.bfloat16)
    # final linear (no activation), stored in f32 (lane-dense padded width)
    out = jnp.dot(h, w6[...], preferred_element_type=jnp.float32) + b6[...]
    o_ref[...] = out


def pack_params(params, input_dim):
    """Pad weights/biases to lane-full shapes; weights -> bf16, biases -> f32.

    Returns (flat list [w1,b1,...,w6,b6], padded dims tuple)."""
    dims = (input_dim,) + HIDDEN
    dims_pad = tuple(_round_up(d, LANE) for d in dims)
    packed = []
    for i, (w, b) in enumerate(params):
        kp, np_ = dims_pad[i], dims_pad[i + 1]
        w_pad = jnp.zeros((kp, np_), jnp.bfloat16)
        w_pad = w_pad.at[:w.shape[0], :w.shape[1]].set(w.astype(jnp.bfloat16))
        b_pad = jnp.zeros((1, np_), jnp.float32)
        b_pad = b_pad.at[:, :b.shape[1]].set(b.astype(jnp.float32))
        packed.extend([w_pad, b_pad])
    return packed, dims_pad


def mlp_forward(x, params, tile_b=DEFAULT_TILE_B):
    """params: list of (W [in,out], b [1,out]) f32 master tuples, len 6."""
    B, D = x.shape
    packed, dims_pad = pack_params(params, D)
    d_pad = dims_pad[0]
    n_out_pad = dims_pad[-1]

    # batch tiling: tile must be sublane-aligned; pad batch to a tile multiple
    tb = max(SUBLANE, min(tile_b, _round_up(B, SUBLANE)))
    b_pad = _round_up(B, tb)
    x_pad = jnp.zeros((b_pad, d_pad), jnp.bfloat16)
    x_pad = x_pad.at[:B, :D].set(x.astype(jnp.bfloat16))

    grid = (b_pad // tb,)

    in_specs = [pl.BlockSpec((tb, d_pad), lambda i: (i, 0))]
    for j in range(len(HIDDEN)):
        kp, np_ = dims_pad[j], dims_pad[j + 1]
        # constant index_map: weight/bias blocks stay resident, no per-step DMA
        in_specs.append(pl.BlockSpec((kp, np_), lambda i: (0, 0)))
        in_specs.append(pl.BlockSpec((1, np_), lambda i: (0, 0)))
    out_spec = pl.BlockSpec((tb, n_out_pad), lambda i: (i, 0))

    flops = 2 * b_pad * sum(dims_pad[j] * dims_pad[j + 1]
                            for j in range(len(HIDDEN)))
    bytes_accessed = (x_pad.size * 2 + b_pad * n_out_pad * 4 +
                      sum(int(p.size) * p.dtype.itemsize for p in packed))
    cost = pl.CostEstimate(flops=flops, transcendentals=0,
                           bytes_accessed=bytes_accessed)

    out_full = pl.pallas_call(
        mlp_kernel,
        out_shape=jax.ShapeDtypeStruct((b_pad, n_out_pad), jnp.float32),
        grid=grid,
        in_specs=in_specs,
        out_specs=out_spec,
        compiler_params=pltpu.CompilerParams(
            dimension_semantics=("parallel",)),
        cost_estimate=cost,
    )(x_pad, *packed)

    # strip batch and lane padding -> [B, 1]
    return out_full[:B, :HIDDEN[-1]]


def init_params(key, input_dim):
    """Deterministic init mirroring the PyTorch module:
    kaiming_uniform_(weight, nonlinearity='relu') and default Linear bias init."""
    params = []
    dims = (input_dim,) + HIDDEN
    for i in range(len(HIDDEN)):
        fan_in, fan_out = dims[i], dims[i + 1]
        key, kw, kb = jax.random.split(key, 3)
        # kaiming uniform (relu): gain = sqrt(2), bound = sqrt(3)*gain/sqrt(fan_in)
        bound_w = (3.0 ** 0.5) * (2.0 ** 0.5) / (fan_in ** 0.5)
        # stored as [in, out] (transpose of torch's [out, in])
        w = jax.random.uniform(kw, (fan_in, fan_out), jnp.float32,
                               minval=-bound_w, maxval=bound_w)
        # torch default bias: U(-1/sqrt(fan_in), 1/sqrt(fan_in))
        bound_b = 1.0 / (fan_in ** 0.5)
        b = jax.random.uniform(kb, (1, fan_out), jnp.float32,
                               minval=-bound_b, maxval=bound_b)
        params.append((w, b))
    return params


def reference_forward_f32(x, params):
    h = x
    for i, (w, b) in enumerate(params):
        h = h @ w + b
        if i < len(params) - 1:
            h = jnp.maximum(h, 0.0)
    return h


def reference_forward_bf16(x, params):
    """Pure-JAX emulation of the kernel's mixed-precision math."""
    h = x.astype(jnp.bfloat16)
    acc_out = None
    for i, (w, b) in enumerate(params):
        acc = jnp.dot(h, w.astype(jnp.bfloat16),
                      preferred_element_type=jnp.float32) + b
        if i < len(params) - 1:
            h = jnp.maximum(acc, 0.0).astype(jnp.bfloat16)
        else:
            acc_out = acc
    return acc_out


if __name__ == "__main__":
    key = jax.random.PRNGKey(0)
    batch, input_dim = 8, 32

    k_x, k_p = jax.random.split(key)
    x = jax.random.normal(k_x, (batch, input_dim), jnp.float32)
    params = init_params(k_p, input_dim)

    out = mlp_forward(x, params)
    out = jax.block_until_ready(out)

    assert out.shape == (batch, 1)

    # tight check vs. a pure-JAX emulation of the kernel's bf16/f32 math
    ref_bf16 = reference_forward_bf16(x, params)
    assert jnp.allclose(out, ref_bf16, atol=1e-2, rtol=1e-2), \
        "mismatch vs bf16 reference"

    # sanity check vs. the full-f32 reference (bf16 rounding tolerance)
    ref_f32 = reference_forward_f32(x, params)
    assert jnp.allclose(out, ref_f32, atol=1e-1, rtol=1e-1), \
        "mismatch vs f32 reference"

    print("KERNEL_OK")
</pallas_src>

<mosaic_0001>
module attributes {stable_mosaic.version = 11 : i64} {
  func.func @mlp_kernel(%arg0: i32, %arg1: memref<8x128xbf16, #tpu.memory_space<vmem>>, %arg2: memref<128x512xbf16, #tpu.memory_space<vmem>>, %arg3: memref<1x512xf32, #tpu.memory_space<vmem>>, %arg4: memref<512x256xbf16, #tpu.memory_space<vmem>>, %arg5: memref<1x256xf32, #tpu.memory_space<vmem>>, %arg6: memref<256x128xbf16, #tpu.memory_space<vmem>>, %arg7: memref<1x128xf32, #tpu.memory_space<vmem>>, %arg8: memref<128x128xbf16, #tpu.memory_space<vmem>>, %arg9: memref<1x128xf32, #tpu.memory_space<vmem>>, %arg10: memref<128x128xbf16, #tpu.memory_space<vmem>>, %arg11: memref<1x128xf32, #tpu.memory_space<vmem>>, %arg12: memref<128x128xbf16, #tpu.memory_space<vmem>>, %arg13: memref<1x128xf32, #tpu.memory_space<vmem>>, %arg14: memref<8x128xf32, #tpu.memory_space<vmem>>) attributes {dimension_semantics = [#tpu.dimension_semantics<parallel>], iteration_bounds = array<i64: 1>, scalar_prefetch = 0 : i64, scratch_operands = 0 : i64, tpu.core_type = #tpu.core_type<tc>, window_params = [{transform_indices = @transform_0, window_bounds = array<i64: 8, 128>}, {pipeline_mode = #tpu.pipeline_mode<synchronous>, transform_indices = @transform_1, window_bounds = array<i64: 128, 512>}, {pipeline_mode = #tpu.pipeline_mode<synchronous>, transform_indices = @transform_2, window_bounds = array<i64: 1, 512>}, {pipeline_mode = #tpu.pipeline_mode<synchronous>, transform_indices = @transform_3, window_bounds = array<i64: 512, 256>}, {pipeline_mode = #tpu.pipeline_mode<synchronous>, transform_indices = @transform_4, window_bounds = array<i64: 1, 256>}, {pipeline_mode = #tpu.pipeline_mode<synchronous>, transform_indices = @transform_5, window_bounds = array<i64: 256, 128>}, {pipeline_mode = #tpu.pipeline_mode<synchronous>, transform_indices = @transform_6, window_bounds = array<i64: 1, 128>}, {pipeline_mode = #tpu.pipeline_mode<synchronous>, transform_indices = @transform_7, window_bounds = array<i64: 128, 128>}, {pipeline_mode = #tpu.pipeline_mode<synchronous>, transform_indices = @transform_8, window_bounds = array<i64: 1, 128>}, {pipeline_mode = #tpu.pipeline_mode<synchronous>, transform_indices = @transform_9, window_bounds = array<i64: 128, 128>}, {pipeline_mode = #tpu.pipeline_mode<synchronous>, transform_indices = @transform_10, window_bounds = array<i64: 1, 128>}, {pipeline_mode = #tpu.pipeline_mode<synchronous>, transform_indices = @transform_11, window_bounds = array<i64: 128, 128>}, {pipeline_mode = #tpu.pipeline_mode<synchronous>, transform_indices = @transform_12, window_bounds = array<i64: 1, 128>}, {transform_indices = @transform_13, window_bounds = array<i64: 8, 128>}]} {
    %c0 = arith.constant 0 : index
    %c0_0 = arith.constant 0 : index
    %0 = vector.load %arg1[%c0, %c0_0] : memref<8x128xbf16, #tpu.memory_space<vmem>>, vector<8x128xbf16>
    %c0_1 = arith.constant 0 : index
    %c0_2 = arith.constant 0 : index
    %1 = vector.load %arg2[%c0_1, %c0_2] : memref<128x512xbf16, #tpu.memory_space<vmem>>, vector<128x512xbf16>
    %cst = arith.constant dense<0.000000e+00> : vector<8x512xf32>
    %2 = tpu.matmul %0, %1, %cst {dimension_numbers = #tpu.dot_dimension_numbers<[1], [0], [0], [1], [0, 0, 1, 1], [], []>} : vector<8x128xbf16>, vector<128x512xbf16>, vector<8x512xf32> -> vector<8x512xf32>
    %c0_3 = arith.constant 0 : index
    %c0_4 = arith.constant 0 : index
    %3 = vector.load %arg3[%c0_3, %c0_4] : memref<1x512xf32, #tpu.memory_space<vmem>>, vector<1x512xf32>
    %4 = vector.broadcast %3 : vector<1x512xf32> to vector<8x512xf32>
    %5 = arith.addf %2, %4 : vector<8x512xf32>
    %cst_5 = arith.constant 0.000000e+00 : f32
    %6 = vector.broadcast %cst_5 : f32 to vector<8x512xf32>
    %7 = arith.maximumf %5, %6 : vector<8x512xf32>
    %8 = arith.truncf %7 : vector<8x512xf32> to vector<8x512xbf16>
    %c0_6 = arith.constant 0 : index
    %c0_7 = arith.constant 0 : index
    %9 = vector.load %arg4[%c0_6, %c0_7] : memref<512x256xbf16, #tpu.memory_space<vmem>>, vector<512x256xbf16>
    %cst_8 = arith.constant dense<0.000000e+00> : vector<8x256xf32>
    %10 = tpu.matmul %8, %9, %cst_8 {dimension_numbers = #tpu.dot_dimension_numbers<[1], [0], [0], [1], [0, 0, 1, 1], [], []>} : vector<8x512xbf16>, vector<512x256xbf16>, vector<8x256xf32> -> vector<8x256xf32>
    %c0_9 = arith.constant 0 : index
    %c0_10 = arith.constant 0 : index
    %11 = vector.load %arg5[%c0_9, %c0_10] : memref<1x256xf32, #tpu.memory_space<vmem>>, vector<1x256xf32>
    %12 = vector.broadcast %11 : vector<1x256xf32> to vector<8x256xf32>
    %13 = arith.addf %10, %12 : vector<8x256xf32>
    %cst_11 = arith.constant 0.000000e+00 : f32
    %14 = vector.broadcast %cst_11 : f32 to vector<8x256xf32>
    %15 = arith.maximumf %13, %14 : vector<8x256xf32>
    %16 = arith.truncf %15 : vector<8x256xf32> to vector<8x256xbf16>
    %c0_12 = arith.constant 0 : index
    %c0_13 = arith.constant 0 : index
    %17 = vector.load %arg6[%c0_12, %c0_13] : memref<256x128xbf16, #tpu.memory_space<vmem>>, vector<256x128xbf16>
    %cst_14 = arith.constant dense<0.000000e+00> : vector<8x128xf32>
    %18 = tpu.matmul %16, %17, %cst_14 {dimension_numbers = #tpu.dot_dimension_numbers<[1], [0], [0], [1], [0, 0, 1, 1], [], []>} : vector<8x256xbf16>, vector<256x128xbf16>, vector<8x128xf32> -> vector<8x128xf32>
    %c0_15 = arith.constant 0 : index
    %c0_16 = arith.constant 0 : index
    %19 = vector.load %arg7[%c0_15, %c0_16] : memref<1x128xf32, #tpu.memory_space<vmem>>, vector<1x128xf32>
    %20 = vector.broadcast %19 : vector<1x128xf32> to vector<8x128xf32>
    %21 = arith.addf %18, %20 : vector<8x128xf32>
    %cst_17 = arith.constant 0.000000e+00 : f32
    %22 = vector.broadcast %cst_17 : f32 to vector<8x128xf32>
    %23 = arith.maximumf %21, %22 : vector<8x128xf32>
    %24 = arith.truncf %23 : vector<8x128xf32> to vector<8x128xbf16>
    %c0_18 = arith.constant 0 : index
    %c0_19 = arith.constant 0 : index
    %25 = vector.load %arg8[%c0_18, %c0_19] : memref<128x128xbf16, #tpu.memory_space<vmem>>, vector<128x128xbf16>
    %cst_20 = arith.constant dense<0.000000e+00> : vector<8x128xf32>
    %26 = tpu.matmul %24, %25, %cst_20 {dimension_numbers = #tpu.dot_dimension_numbers<[1], [0], [0], [1], [0, 0, 1, 1], [], []>} : vector<8x128xbf16>, vector<128x128xbf16>, vector<8x128xf32> -> vector<8x128xf32>
    %c0_21 = arith.constant 0 : index
    %c0_22 = arith.constant 0 : index
    %27 = vector.load %arg9[%c0_21, %c0_22] : memref<1x128xf32, #tpu.memory_space<vmem>>, vector<1x128xf32>
    %28 = vector.broadcast %27 : vector<1x128xf32> to vector<8x128xf32>
    %29 = arith.addf %26, %28 : vector<8x128xf32>
    %cst_23 = arith.constant 0.000000e+00 : f32
    %30 = vector.broadcast %cst_23 : f32 to vector<8x128xf32>
    %31 = arith.maximumf %29, %30 : vector<8x128xf32>
    %32 = arith.truncf %31 : vector<8x128xf32> to vector<8x128xbf16>
    %c0_24 = arith.constant 0 : index
    %c0_25 = arith.constant 0 : index
    %33 = vector.load %arg10[%c0_24, %c0_25] : memref<128x128xbf16, #tpu.memory_space<vmem>>, vector<128x128xbf16>
    %cst_26 = arith.constant dense<0.000000e+00> : vector<8x128xf32>
    %34 = tpu.matmul %32, %33, %cst_26 {dimension_numbers = #tpu.dot_dimension_numbers<[1], [0], [0], [1], [0, 0, 1, 1], [], []>} : vector<8x128xbf16>, vector<128x128xbf16>, vector<8x128xf32> -> vector<8x128xf32>
    %c0_27 = arith.constant 0 : index
    %c0_28 = arith.constant 0 : index
    %35 = vector.load %arg11[%c0_27, %c0_28] : memref<1x128xf32, #tpu.memory_space<vmem>>, vector<1x128xf32>
    %36 = vector.broadcast %35 : vector<1x128xf32> to vector<8x128xf32>
    %37 = arith.addf %34, %36 : vector<8x128xf32>
    %cst_29 = arith.constant 0.000000e+00 : f32
    %38 = vector.broadcast %cst_29 : f32 to vector<8x128xf32>
    %39 = arith.maximumf %37, %38 : vector<8x128xf32>
    %40 = arith.truncf %39 : vector<8x128xf32> to vector<8x128xbf16>
    %c0_30 = arith.constant 0 : index
    %c0_31 = arith.constant 0 : index
    %41 = vector.load %arg12[%c0_30, %c0_31] : memref<128x128xbf16, #tpu.memory_space<vmem>>, vector<128x128xbf16>
    %cst_32 = arith.constant dense<0.000000e+00> : vector<8x128xf32>
    %42 = tpu.matmul %40, %41, %cst_32 {dimension_numbers = #tpu.dot_dimension_numbers<[1], [0], [0], [1], [0, 0, 1, 1], [], []>} : vector<8x128xbf16>, vector<128x128xbf16>, vector<8x128xf32> -> vector<8x128xf32>
    %c0_33 = arith.constant 0 : index
    %c0_34 = arith.constant 0 : index
    %43 = vector.load %arg13[%c0_33, %c0_34] : memref<1x128xf32, #tpu.memory_space<vmem>>, vector<1x128xf32>
    %44 = vector.broadcast %43 : vector<1x128xf32> to vector<8x128xf32>
    %45 = arith.addf %42, %44 : vector<8x128xf32>
    %c0_35 = arith.constant 0 : index
    %c0_36 = arith.constant 0 : index
    %46 = vector.load %arg14[%c0_35, %c0_36] : memref<8x128xf32, #tpu.memory_space<vmem>>, vector<8x128xf32>
    tpu.vector_store %arg14[%c0_35, %c0_36], %45 {strides = array<i32>} : memref<8x128xf32, #tpu.memory_space<vmem>>, vector<8x128xf32>,
    return
  }
  func.func @transform_0(%arg0: i32) -> (i32, i32) {
    %c0_i32 = arith.constant 0 : i32
    %c0_i32_0 = arith.constant 0 : i32
    return %arg0, %c0_i32 : i32, i32
  }
  func.func @transform_1(%arg0: i32) -> (i32, i32) {
    %c0_i32 = arith.constant 0 : i32
    %c0_i32_0 = arith.constant 0 : i32
    %c0_i32_1 = arith.constant 0 : i32
    return %c0_i32, %c0_i32_0 : i32, i32
  }
  func.func @transform_2(%arg0: i32) -> (i32, i32) {
    %c0_i32 = arith.constant 0 : i32
    %c0_i32_0 = arith.constant 0 : i32
    %c0_i32_1 = arith.constant 0 : i32
    return %c0_i32, %c0_i32_0 : i32, i32
  }
  func.func @transform_3(%arg0: i32) -> (i32, i32) {
    %c0_i32 = arith.constant 0 : i32
    %c0_i32_0 = arith.constant 0 : i32
    %c0_i32_1 = arith.constant 0 : i32
    return %c0_i32, %c0_i32_0 : i32, i32
  }
  func.func @transform_4(%arg0: i32) -> (i32, i32) {
    %c0_i32 = arith.constant 0 : i32
    %c0_i32_0 = arith.constant 0 : i32
    %c0_i32_1 = arith.constant 0 : i32
    return %c0_i32, %c0_i32_0 : i32, i32
  }
  func.func @transform_5(%arg0: i32) -> (i32, i32) {
    %c0_i32 = arith.constant 0 : i32
    %c0_i32_0 = arith.constant 0 : i32
    %c0_i32_1 = arith.constant 0 : i32
    return %c0_i32, %c0_i32_0 : i32, i32
  }
  func.func @transform_6(%arg0: i32) -> (i32, i32) {
    %c0_i32 = arith.constant 0 : i32
    %c0_i32_0 = arith.constant 0 : i32
    %c0_i32_1 = arith.constant 0 : i32
    return %c0_i32, %c0_i32_0 : i32, i32
  }
  func.func @transform_7(%arg0: i32) -> (i32, i32) {
    %c0_i32 = arith.constant 0 : i32
    %c0_i32_0 = arith.constant 0 : i32
    %c0_i32_1 = arith.constant 0 : i32
    return %c0_i32, %c0_i32_0 : i32, i32
  }
  func.func @transform_8(%arg0: i32) -> (i32, i32) {
    %c0_i32 = arith.constant 0 : i32
    %c0_i32_0 = arith.constant 0 : i32
    %c0_i32_1 = arith.constant 0 : i32
    return %c0_i32, %c0_i32_0 : i32, i32
  }
  func.func @transform_9(%arg0: i32) -> (i32, i32) {
    %c0_i32 = arith.constant 0 : i32
    %c0_i32_0 = arith.constant 0 : i32
    %c0_i32_1 = arith.constant 0 : i32
    return %c0_i32, %c0_i32_0 : i32, i32
  }
  func.func @transform_10(%arg0: i32) -> (i32, i32) {
    %c0_i32 = arith.constant 0 : i32
    %c0_i32_0 = arith.constant 0 : i32
    %c0_i32_1 = arith.constant 0 : i32
    return %c0_i32, %c0_i32_0 : i32, i32
  }
  func.func @transform_11(%arg0: i32) -> (i32, i32) {
    %c0_i32 = arith.constant 0 : i32
    %c0_i32_0 = arith.constant 0 : i32
    %c0_i32_1 = arith.constant 0 : i32
    return %c0_i32, %c0_i32_0 : i32, i32
  }
  func.func @transform_12(%arg0: i32) -> (i32, i32) {
    %c0_i32 = arith.constant 0 : i32
    %c0_i32_0 = arith.constant 0 : i32
    %c0_i32_1 = arith.constant 0 : i32
    return %c0_i32, %c0_i32_0 : i32, i32
  }
  func.func @transform_13(%arg0: i32) -> (i32, i32) {
    %c0_i32 = arith.constant 0 : i32
    %c0_i32_0 = arith.constant 0 : i32
    return %arg0, %c0_i32 : i32, i32
  }
}

</mosaic_0001>

<llo_original>
// kernel: tpu_custom_call.1
$region0: #{tpu_custom_call.1}
  #allocation0 [shape = 'u32[]', space=smem, size = 0x4, offset = 0x4, fixed_abs, tag = 'smem constant byte address 0x4 - core index']
  #allocation1 [shape = 'u32[144,128]{1,0:T(1,128)}', space=vmem, size = 0x12000, scoped, tag = 'internal scratch']
  %s0 = inlined_call_operand.hbm [shape: bf16[8,128], index: 0, kind: input, shape index: {}]
  %s1 = inlined_call_operand.hbm [shape: bf16[128,512], index: 1, kind: input, shape index: {}]
  %s2 = inlined_call_operand.hbm [shape: f32[1,512], index: 2, kind: input, shape index: {}]
  %s3 = inlined_call_operand.hbm [shape: bf16[512,256], index: 3, kind: input, shape index: {}]
  %s4 = inlined_call_operand.vmem [shape: f32[1,256], index: 4, kind: input, shape index: {}]
  %s5 = inlined_call_operand.hbm [shape: bf16[256,128], index: 5, kind: input, shape index: {}]
  %s6 = inlined_call_operand.vmem [shape: f32[1,128], index: 6, kind: input, shape index: {}]
  %s7 = inlined_call_operand.hbm [shape: bf16[128,128], index: 7, kind: input, shape index: {}]
  %s8 = inlined_call_operand.vmem [shape: f32[1,128], index: 8, kind: input, shape index: {}]
  %s9 = inlined_call_operand.hbm [shape: bf16[128,128], index: 9, kind: input, shape index: {}]
  %s10 = inlined_call_operand.vmem [shape: f32[1,128], index: 10, kind: input, shape index: {}]
  %s11 = inlined_call_operand.hbm [shape: bf16[128,128], index: 11, kind: input, shape index: {}]
  %s12 = inlined_call_operand.vmem [shape: f32[1,128], index: 12, kind: input, shape index: {}]
  %s13 = inlined_call_operand.hbm [shape: f32[8,128], index: 13, kind: output, shape index: {}]
  %s14 = sld [smem:[#allocation0]]
  $region94: #{tpu_custom_call.1} parent=0
    _
  %s16 = ssub.s32 1, %s14
  %s17 = scalar_select 0, %s16, %s14
  $region1: #{tpu_custom_call.1} parent=0
    #allocation2 [shape = 'u8[2048]{0}', space=vmem, size = 0x800, scoped, tag = 'input window, operand 0, single buffered']
    #allocation3 [shape = 's32[1]{0}', space=sflag, size = 0x4, scoped, tag = 'scoped memory for tpu_custom_call.1']
    #allocation4 [shape = 's32[1]{0}', space=sflag, size = 0x4, scoped, tag = 'scoped memory for tpu_custom_call.1']
    #allocation5 [shape = 'u8[131072]{0}', space=vmem, size = 0x20000, scoped, tag = 'input window, operand 1, single buffered']
    #allocation6 [shape = 's32[1]{0}', space=sflag, size = 0x4, scoped, tag = 'scoped memory for tpu_custom_call.1']
    #allocation7 [shape = 'u8[2048]{0}', space=vmem, size = 0x800, scoped, tag = 'input window, operand 2, single buffered']
    #allocation8 [shape = 'u8[262144]{0}', space=vmem, size = 0x40000, scoped, tag = 'input window, operand 3, single buffered']
    #allocation9 [shape = 's32[1]{0}', space=sflag, size = 0x4, scoped, tag = 'scoped memory for tpu_custom_call.1']
    #allocation10 [shape = 'u8[65536]{0}', space=vmem, size = 0x10000, scoped, tag = 'input window, operand 5, single buffered']
    #allocation11 [shape = 'u8[32768]{0}', space=vmem, size = 0x8000, scoped, tag = 'input window, operand 7, single buffered']
    #allocation12 [shape = 's32[1]{0}', space=sflag, size = 0x4, scoped, tag = 'scoped memory for tpu_custom_call.1']
    #allocation13 [shape = 'u8[32768]{0}', space=vmem, size = 0x8000, scoped, tag = 'input window, operand 9, single buffered']
    #allocation14 [shape = 'u8[32768]{0}', space=vmem, size = 0x8000, scoped, tag = 'input window, operand 11, single buffered']
    #allocation15 [shape = 's32[1]{0}', space=sflag, size = 0x4, scoped, tag = 'scoped memory for tpu_custom_call.1']
    #allocation16 [shape = 'u8[4096]{0}', space=vmem, size = 0x1000, scoped, tag = 'output window, operand 0, single buffered']
    %18 = vsyncpa [#allocation3], 0
    %19 = vsyncpa [#allocation6], 0
    %20 = vsyncpa [#allocation9], 0
    %21 = vsyncpa [#allocation12], 0
    %22 = vsyncpa [#allocation15], 0
    %23 = vsyncpa [#allocation4], 0
    // Predicated region
    $region2: #{tpu_custom_call.1} parent=1 // pred_check
      _
    $region3: #{tpu_custom_call.1} parent=1 // pred_check_branch
      %25 = sbr.rel (0) target = $region5
    $region4: #{tpu_custom_call.1} parent=1 // pred_region
      %s27 = ssub.s32 64, 64
      %28 = vsyncadd [#allocation3], %s27
      %s30 = sshll.u32 [#allocation2], 4
      %s31 = int_to_ptr.vmem [resolvable:$true] %s30
      %33 = dma.hbm_to_vmem [thread:$0]  %s0, 64, %s31, [#allocation3]
    $region5: #{tpu_custom_call.1} parent=1 // pred_fallthru
      _
    // Predicated region
    $region6: #{tpu_custom_call.1} parent=1 // pred_check
      _
    $region7: #{tpu_custom_call.1} parent=1 // pred_check_branch
      %35 = sbr.rel (0) target = $region9
    $region8: #{tpu_custom_call.1} parent=1 // pred_region
      %s37 = ssub.s32 4096, 4096
      %38 = vsyncadd [#allocation6], %s37
      %s39 = sshll.u32 [#allocation5], 4
      %s40 = int_to_ptr.vmem [resolvable:$true] %s39
      %45 = dma.hbm_to_vmem [thread:$0]  %s1, 4096, %s40, [#allocation6], 256, 256, 16
    $region9: #{tpu_custom_call.1} parent=1 // pred_fallthru
      _
    // Predicated region
    $region10: #{tpu_custom_call.1} parent=1 // pred_check
      _
    $region11: #{tpu_custom_call.1} parent=1 // pred_check_branch
      %47 = sbr.rel (0) target = $region13
    $region12: #{tpu_custom_call.1} parent=1 // pred_region
      %s49 = ssub.s32 64, 64
      %50 = vsyncadd [#allocation6], %s49
      %s52 = sshll.u32 [#allocation7], 4
      %s53 = int_to_ptr.vmem [resolvable:$true] %s52
      %55 = dma.hbm_to_vmem [thread:$0]  %s2, 64, %s53, [#allocation6]
    $region13: #{tpu_custom_call.1} parent=1 // pred_fallthru
      _
    // Predicated region
    $region14: #{tpu_custom_call.1} parent=1 // pred_check
      _
    $region15: #{tpu_custom_call.1} parent=1 // pred_check_branch
      %57 = sbr.rel (0) target = $region17
    $region16: #{tpu_custom_call.1} parent=1 // pred_region
      %s59 = ssub.s32 8192, 8192
      %60 = vsyncadd [#allocation9], %s59
      %s61 = sshll.u32 [#allocation8], 4
      %s62 = int_to_ptr.vmem [resolvable:$true] %s61
      %67 = dma.hbm_to_vmem [thread:$0]  %s3, 8192, %s62, [#allocation9], 128, 128, 8
    $region17: #{tpu_custom_call.1} parent=1 // pred_fallthru
      _
    // Predicated region
    $region18: #{tpu_custom_call.1} parent=1 // pred_check
      _
    $region19: #{tpu_custom_call.1} parent=1 // pred_check_branch
      %69 = sbr.rel (0) target = $region21
    $region20: #{tpu_custom_call.1} parent=1 // pred_region
      _
    $region21: #{tpu_custom_call.1} parent=1 // pred_fallthru
      _
    // Predicated region
    $region22: #{tpu_custom_call.1} parent=1 // pred_check
      _
    $region23: #{tpu_custom_call.1} parent=1 // pred_check_branch
      %71 = sbr.rel (0) target = $region25
    $region24: #{tpu_custom_call.1} parent=1 // pred_region
      %s73 = ssub.s32 2048, 2048
      %74 = vsyncadd [#allocation9], %s73
      %s75 = sshll.u32 [#allocation10], 4
      %s76 = int_to_ptr.vmem [resolvable:$true] %s75
      %81 = dma.hbm_to_vmem [thread:$0]  %s5, 2048, %s76, [#allocation9], 64, 64, 4
    $region25: #{tpu_custom_call.1} parent=1 // pred_fallthru
      _
    // Predicated region
    $region26: #{tpu_custom_call.1} parent=1 // pred_check
      _
    $region27: #{tpu_custom_call.1} parent=1 // pred_check_branch
      %83 = sbr.rel (0) target = $region29
    $region28: #{tpu_custom_call.1} parent=1 // pred_region
      _
    $region29: #{tpu_custom_call.1} parent=1 // pred_fallthru
      _
    // Predicated region
    $region30: #{tpu_custom_call.1} parent=1 // pred_check
      _
    $region31: #{tpu_custom_call.1} parent=1 // pred_check_branch
      %85 = sbr.rel (0) target = $region33
    $region32: #{tpu_custom_call.1} parent=1 // pred_region
      %s87 = ssub.s32 1024, 1024
      %88 = vsyncadd [#allocation12], %s87
      %s89 = sshll.u32 [#allocation11], 4
      %s90 = int_to_ptr.vmem [resolvable:$true] %s89
      %95 = dma.hbm_to_vmem [thread:$0]  %s7, 1024, %s90, [#allocation12], 64, 64, 4
    $region33: #{tpu_custom_call.1} parent=1 // pred_fallthru
      _
    // Predicated region
    $region34: #{tpu_custom_call.1} parent=1 // pred_check
      _
    $region35: #{tpu_custom_call.1} parent=1 // pred_check_branch
      %97 = sbr.rel (0) target = $region37
    $region36: #{tpu_custom_call.1} parent=1 // pred_region
      _
    $region37: #{tpu_custom_call.1} parent=1 // pred_fallthru
      _
    // Predicated region
    $region38: #{tpu_custom_call.1} parent=1 // pred_check
      _
    $region39: #{tpu_custom_call.1} parent=1 // pred_check_branch
      %99 = sbr.rel (0) target = $region41
    $region40: #{tpu_custom_call.1} parent=1 // pred_region
      %s101 = ssub.s32 1024, 1024
      %102 = vsyncadd [#allocation12], %s101
      %s103 = sshll.u32 [#allocation13], 4
      %s104 = int_to_ptr.vmem [resolvable:$true] %s103
      %109 = dma.hbm_to_vmem [thread:$0]  %s9, 1024, %s104, [#allocation12], 64, 64, 4
    $region41: #{tpu_custom_call.1} parent=1 // pred_fallthru
      _
    // Predicated region
    $region42: #{tpu_custom_call.1} parent=1 // pred_check
      _
    $region43: #{tpu_custom_call.1} parent=1 // pred_check_branch
      %111 = sbr.rel (0) target = $region45
    $region44: #{tpu_custom_call.1} parent=1 // pred_region
      _
    $region45: #{tpu_custom_call.1} parent=1 // pred_fallthru
      _
    // Predicated region
    $region46: #{tpu_custom_call.1} parent=1 // pred_check
      _
    $region47: #{tpu_custom_call.1} parent=1 // pred_check_branch
      %113 = sbr.rel (0) target = $region49
    $region48: #{tpu_custom_call.1} parent=1 // pred_region
      %s115 = ssub.s32 1024, 1024
      %116 = vsyncadd [#allocation15], %s115
      %s117 = sshll.u32 [#allocation14], 4
      %s118 = int_to_ptr.vmem [resolvable:$true] %s117
      %123 = dma.hbm_to_vmem [thread:$0]  %s11, 1024, %s118, [#allocation15], 64, 64, 4
    $region49: #{tpu_custom_call.1} parent=1 // pred_fallthru
      _
    // Predicated region
    $region50: #{tpu_custom_call.1} parent=1 // pred_check
      _
    $region51: #{tpu_custom_call.1} parent=1 // pred_check_branch
      %125 = sbr.rel (0) target = $region53
    $region52: #{tpu_custom_call.1} parent=1 // pred_region
      _
    $region53: #{tpu_custom_call.1} parent=1 // pred_fallthru
      _
    // Predicated region
    $region54: #{tpu_custom_call.1} parent=1 // pred_check
      _
    $region55: #{tpu_custom_call.1} parent=1 // pred_check_branch
      %127 = sbr.rel (0) target = $region57
    $region56: #{tpu_custom_call.1} parent=1 // pred_region
      %128 = dma.done [#allocation3], 64
    $region57: #{tpu_custom_call.1} parent=1 // pred_fallthru
      _
    // Predicated region
    $region58: #{tpu_custom_call.1} parent=1 // pred_check
      _
    $region59: #{tpu_custom_call.1} parent=1 // pred_check_branch
      %130 = sbr.rel (0) target = $region61
    $region60: #{tpu_custom_call.1} parent=1 // pred_region
      %131 = dma.done [#allocation6], 4096
    $region61: #{tpu_custom_call.1} parent=1 // pred_fallthru
      _
    // Predicated region
    $region62: #{tpu_custom_call.1} parent=1 // pred_check
      _
    $region63: #{tpu_custom_call.1} parent=1 // pred_check_branch
      %133 = sbr.rel (0) target = $region65
    $region64: #{tpu_custom_call.1} parent=1 // pred_region
      %134 = dma.done [#allocation6], 64
    $region65: #{tpu_custom_call.1} parent=1 // pred_fallthru
      _
    // Predicated region
    $region66: #{tpu_custom_call.1} parent=1 // pred_check
      _
    $region67: #{tpu_custom_call.1} parent=1 // pred_check_branch
      %136 = sbr.rel (0) target = $region69
    $region68: #{tpu_custom_call.1} parent=1 // pred_region
      %137 = dma.done [#allocation9], 8192
    $region69: #{tpu_custom_call.1} parent=1 // pred_fallthru
      _
    // Predicated region
    $region70: #{tpu_custom_call.1} parent=1 // pred_check
      _
    $region71: #{tpu_custom_call.1} parent=1 // pred_check_branch
      %139 = sbr.rel (0) target = $region73
    $region72: #{tpu_custom_call.1} parent=1 // pred_region
      %140 = dma.done [#allocation9], 2048
    $region73: #{tpu_custom_call.1} parent=1 // pred_fallthru
      _
    // Predicated region
    $region74: #{tpu_custom_call.1} parent=1 // pred_check
      _
    $region75: #{tpu_custom_call.1} parent=1 // pred_check_branch
      %142 = sbr.rel (0) target = $region77
    $region76: #{tpu_custom_call.1} parent=1 // pred_region
      %143 = dma.done [#allocation12], 1024
    $region77: #{tpu_custom_call.1} parent=1 // pred_fallthru
      _
    // Predicated region
    $region78: #{tpu_custom_call.1} parent=1 // pred_check
      _
    $region79: #{tpu_custom_call.1} parent=1 // pred_check_branch
      %145 = sbr.rel (0) target = $region81
    $region80: #{tpu_custom_call.1} parent=1 // pred_region
      %146 = dma.done [#allocation12], 1024
    $region81: #{tpu_custom_call.1} parent=1 // pred_fallthru
      _
    // Predicated region
    $region82: #{tpu_custom_call.1} parent=1 // pred_check
      _
    $region83: #{tpu_custom_call.1} parent=1 // pred_check_branch
      %148 = sbr.rel (0) target = $region85
    $region84: #{tpu_custom_call.1} parent=1 // pred_region
      %149 = dma.done [#allocation15], 1024
    $region85: #{tpu_custom_call.1} parent=1 // pred_fallthru
      _
    %v151 = vld [vmem:[#allocation2] sm:$0xf]
    %v152 = vld [vmem:[#allocation5] sm:$0xff]
    %v153 = vld [vmem:[#allocation5 + $0x8] sm:$0xff]
    %v154 = vld [vmem:[#allocation5 + $0x10] sm:$0xff]
    %v155 = vld [vmem:[#allocation5 + $0x18] sm:$0xff]
    %v156 = vld [vmem:[#allocation5 + $0x20] sm:$0xff]
    %v157 = vld [vmem:[#allocation5 + $0x28] sm:$0xff]
    %v158 = vld [vmem:[#allocation5 + $0x30] sm:$0xff]
    %v159 = vld [vmem:[#allocation5 + $0x38] sm:$0xff]
    %v160 = vld [vmem:[#allocation5 + $0x40] sm:$0xff]
    %v161 = vld [vmem:[#allocation5 + $0x48] sm:$0xff]
    %v162 = vld [vmem:[#allocation5 + $0x50] sm:$0xff]
    %v163 = vld [vmem:[#allocation5 + $0x58] sm:$0xff]
    %v164 = vld [vmem:[#allocation5 + $0x60] sm:$0xff]
    %v165 = vld [vmem:[#allocation5 + $0x68] sm:$0xff]
    %v166 = vld [vmem:[#allocation5 + $0x70] sm:$0xff]
    %v167 = vld [vmem:[#allocation5 + $0x78] sm:$0xff]
    %v168 = vld [vmem:[#allocation5 + $0x80] sm:$0xff]
    %v169 = vld [vmem:[#allocation5 + $0x88] sm:$0xff]
    %v170 = vld [vmem:[#allocation5 + $0x90] sm:$0xff]
    %v171 = vld [vmem:[#allocation5 + $0x98] sm:$0xff]
    %v172 = vld [vmem:[#allocation5 + $0xa0] sm:$0xff]
    %v173 = vld [vmem:[#allocation5 + $0xa8] sm:$0xff]
    %v174 = vld [vmem:[#allocation5 + $0xb0] sm:$0xff]
    %v175 = vld [vmem:[#allocation5 + $0xb8] sm:$0xff]
    %v176 = vld [vmem:[#allocation5 + $0xc0] sm:$0xff]
    %v177 = vld [vmem:[#allocation5 + $0xc8] sm:$0xff]
    %v178 = vld [vmem:[#allocation5 + $0xd0] sm:$0xff]
    %v179 = vld [vmem:[#allocation5 + $0xd8] sm:$0xff]
    %v180 = vld [vmem:[#allocation5 + $0xe0] sm:$0xff]
    %v181 = vld [vmem:[#allocation5 + $0xe8] sm:$0xff]
    %v182 = vld [vmem:[#allocation5 + $0xf0] sm:$0xff]
    %v183 = vld [vmem:[#allocation5 + $0xf8] sm:$0xff]
    %v184 = vld [vmem:[#allocation7] sm:$0xf]
    %v186 = vlaneseq
    %v187 = vshrl.u32 %v186, 7
    %v188 = vsub.s32 0, %v187
    %v189 = vrot.slane %v184, %v188
    %v190 = vlaneseq
    %v191 = vshrl.u32 %v190, 7
    %v192 = vsub.s32 1, %v191
    %v193 = vrot.slane %v184, %v192
    %v194 = vlaneseq
    %v195 = vshrl.u32 %v194, 7
    %v196 = vsub.s32 2, %v195
    %v197 = vrot.slane %v184, %v196
    %v198 = vlaneseq
    %v199 = vshrl.u32 %v198, 7
    %v200 = vsub.s32 3, %v199
    %v201 = vrot.slane %v184, %v200
    %v238 = vunpack.c.l.b16 %v152
    %v239 = vunpack.c.h.b16 %v152
    %v240 = vunpack.c.l.b16 %v153
    %v241 = vunpack.c.h.b16 %v153
    %v242 = vunpack.c.l.b16 %v154
    %v243 = vunpack.c.h.b16 %v154
    %v244 = vunpack.c.l.b16 %v155
    %v245 = vunpack.c.h.b16 %v155
    %v246 = vunpack.c.l.b16 %v156
    %v247 = vunpack.c.h.b16 %v156
    %v248 = vunpack.c.l.b16 %v157
    %v249 = vunpack.c.h.b16 %v157
    %v250 = vunpack.c.l.b16 %v158
    %v251 = vunpack.c.h.b16 %v158
    %v252 = vunpack.c.l.b16 %v159
    %v253 = vunpack.c.h.b16 %v159
    %v254 = vunpack.c.l.b16 %v160
    %v255 = vunpack.c.h.b16 %v160
    %v256 = vunpack.c.l.b16 %v161
    %v257 = vunpack.c.h.b16 %v161
    %v258 = vunpack.c.l.b16 %v162
    %v259 = vunpack.c.h.b16 %v162
    %v260 = vunpack.c.l.b16 %v163
    %v261 = vunpack.c.h.b16 %v163
    %v262 = vunpack.c.l.b16 %v164
    %v263 = vunpack.c.h.b16 %v164
    %v264 = vunpack.c.l.b16 %v165
    %v265 = vunpack.c.h.b16 %v165
    %v266 = vunpack.c.l.b16 %v166
    %v267 = vunpack.c.h.b16 %v166
    %v268 = vunpack.c.l.b16 %v167
    %v269 = vunpack.c.h.b16 %v167
    %v270 = vunpack.c.l.b16 %v168
    %v271 = vunpack.c.h.b16 %v168
    %v272 = vunpack.c.l.b16 %v169
    %v273 = vunpack.c.h.b16 %v169
    %v274 = vunpack.c.l.b16 %v170
    %v275 = vunpack.c.h.b16 %v170
    %v276 = vunpack.c.l.b16 %v171
    %v277 = vunpack.c.h.b16 %v171
    %v278 = vunpack.c.l.b16 %v172
    %v279 = vunpack.c.h.b16 %v172
    %v280 = vunpack.c.l.b16 %v173
    %v281 = vunpack.c.h.b16 %v173
    %v282 = vunpack.c.l.b16 %v174
    %v283 = vunpack.c.h.b16 %v174
    %v284 = vunpack.c.l.b16 %v175
    %v285 = vunpack.c.h.b16 %v175
    %v286 = vunpack.c.l.b16 %v176
    %v287 = vunpack.c.h.b16 %v176
    %v288 = vunpack.c.l.b16 %v177
    %v289 = vunpack.c.h.b16 %v177
    %v290 = vunpack.c.l.b16 %v178
    %v291 = vunpack.c.h.b16 %v178
    %v292 = vunpack.c.l.b16 %v179
    %v293 = vunpack.c.h.b16 %v179
    %v294 = vunpack.c.l.b16 %v180
    %v295 = vunpack.c.h.b16 %v180
    %v296 = vunpack.c.l.b16 %v181
    %v297 = vunpack.c.h.b16 %v181
    %v298 = vunpack.c.l.b16 %v182
    %v299 = vunpack.c.h.b16 %v182
    %v300 = vunpack.c.l.b16 %v183
    %v301 = vunpack.c.h.b16 %v183
    %v302 = vpack.c.b16 %v242, %v238
    %v303 = vpack.c.b16 %v243, %v239
    %v304 = vpack.c.b16 %v244, %v240
    %v305 = vpack.c.b16 %v245, %v241
    %v306 = vpack.c.b16 %v250, %v246
    %v307 = vpack.c.b16 %v251, %v247
    %v308 = vpack.c.b16 %v252, %v248
    %v309 = vpack.c.b16 %v253, %v249
    %v310 = vpack.c.b16 %v258, %v254
    %v311 = vpack.c.b16 %v259, %v255
    %v312 = vpack.c.b16 %v260, %v256
    %v313 = vpack.c.b16 %v261, %v257
    %v314 = vpack.c.b16 %v266, %v262
    %v315 = vpack.c.b16 %v267, %v263
    %v316 = vpack.c.b16 %v268, %v264
    %v317 = vpack.c.b16 %v269, %v265
    %v318 = vpack.c.b16 %v274, %v270
    %v319 = vpack.c.b16 %v275, %v271
    %v320 = vpack.c.b16 %v276, %v272
    %v321 = vpack.c.b16 %v277, %v273
    %v322 = vpack.c.b16 %v282, %v278
    %v323 = vpack.c.b16 %v283, %v279
    %v324 = vpack.c.b16 %v284, %v280
    %v325 = vpack.c.b16 %v285, %v281
    %v326 = vpack.c.b16 %v290, %v286
    %v327 = vpack.c.b16 %v291, %v287
    %v328 = vpack.c.b16 %v292, %v288
    %v329 = vpack.c.b16 %v293, %v289
    %v330 = vpack.c.b16 %v298, %v294
    %v331 = vpack.c.b16 %v299, %v295
    %v332 = vpack.c.b16 %v300, %v296
    %v333 = vpack.c.b16 %v301, %v297
    %366 = vmatprep.subr.bf16.mxu0 %v331
    %367 = vmatpush1.bf16.msra.mxu0 %v330
    %368 = vmatprep.subr.bf16.mxu0 %v327
    %369 = vmatpush1.bf16.msra.mxu0 %v326
    %370 = vmatprep.subr.bf16.mxu0 %v323
    %371 = vmatpush1.bf16.msra.mxu0 %v322
    %372 = vmatprep.subr.bf16.mxu0 %v319
    %373 = vmatpush1.bf16.msra.mxu0 %v318
    %374 = vmatprep.subr.bf16.mxu0 %v315
    %375 = vmatpush1.bf16.msra.mxu0 %v314
    %376 = vmatprep.subr.bf16.mxu0 %v311
    %377 = vmatpush1.bf16.msra.mxu0 %v310
    %378 = vmatprep.subr.bf16.mxu0 %v307
    %379 = vmatpush1.bf16.msra.mxu0 %v306
    %380 = vmatprep.subr.bf16.mxu0 %v303
    %381 = vmatpush1.bf16.msra.mxu0 %v302
    %382 = vmatprep.subr.bf16.mxu0 0
    %383 = vmatpush2.bf16.msra.mxu0 0
    %384 = vmatprep.subr.bf16.mxu0 0
    %385 = vmatpush2.bf16.msra.mxu0 0
    %386 = vmatprep.subr.bf16.mxu0 0
    %387 = vmatpush2.bf16.msra.mxu0 0
    %388 = vmatprep.subr.bf16.mxu0 0
    %389 = vmatpush2.bf16.msra.mxu0 0
    %390 = vmatprep.subr.bf16.mxu0 0
    %391 = vmatpush2.bf16.msra.mxu0 0
    %392 = vmatprep.subr.bf16.mxu0 0
    %393 = vmatpush2.bf16.msra.mxu0 0
    %394 = vmatprep.subr.bf16.mxu0 0
    %395 = vmatpush2.bf16.msra.mxu0 0
    %396 = vmatprep.subr.bf16.mxu0 0
    %397 = vmatpush2.bf16.msra.mxu0 0
    %398 = vmatprep.mubr.bf16.mxu0 0
    %399 = vmatmul.mubr.bf16.gmra.mxu0 %v151
    %v400 = vpop.f32.mrf.mxu0
    %v401 = vadd.f32 %v189, %v400
    %v402 = vpop.f32.mrf.mxu0
    %v403 = vadd.f32 %v193, %v402
    %v404 = vpop.f32.mrf.mxu0
    %v405 = vpop.f32.mrf.mxu0
    %406 = vdwg.mxu0
    %407 = vmatprep.subr.bf16.mxu0 %v333
    %408 = vmatpush1.bf16.msra.mxu0 %v332
    %409 = vmatprep.subr.bf16.mxu0 %v329
    %410 = vmatpush1.bf16.msra.mxu0 %v328
    %411 = vmatprep.subr.bf16.mxu0 %v325
    %412 = vmatpush1.bf16.msra.mxu0 %v324
    %413 = vmatprep.subr.bf16.mxu0 %v321
    %414 = vmatpush1.bf16.msra.mxu0 %v320
    %415 = vmatprep.subr.bf16.mxu0 %v317
    %416 = vmatpush1.bf16.msra.mxu0 %v316
    %417 = vmatprep.subr.bf16.mxu0 %v313
    %418 = vmatpush1.bf16.msra.mxu0 %v312
    %419 = vmatprep.subr.bf16.mxu0 %v309
    %420 = vmatpush1.bf16.msra.mxu0 %v308
    %421 = vmatprep.subr.bf16.mxu0 %v305
    %422 = vmatpush1.bf16.msra.mxu0 %v304
    %423 = vmatprep.subr.bf16.mxu0 0
    %424 = vmatpush2.bf16.msra.mxu0 0
    %425 = vmatprep.subr.bf16.mxu0 0
    %426 = vmatpush2.bf16.msra.mxu0 0
    %427 = vmatprep.subr.bf16.mxu0 0
    %428 = vmatpush2.bf16.msra.mxu0 0
    %429 = vmatprep.subr.bf16.mxu0 0
    %430 = vmatpush2.bf16.msra.mxu0 0
    %431 = vmatprep.subr.bf16.mxu0 0
    %432 = vmatpush2.bf16.msra.mxu0 0
    %433 = vmatprep.subr.bf16.mxu0 0
    %434 = vmatpush2.bf16.msra.mxu0 0
    %435 = vmatprep.subr.bf16.mxu0 0
    %436 = vmatpush2.bf16.msra.mxu0 0
    %437 = vmatprep.subr.bf16.mxu0 0
    %438 = vmatpush2.bf16.msra.mxu0 0
    %439 = vmatprep.mubr.bf16.mxu0 0
    %440 = vmatmul.mubr.bf16.gmra.mxu0 %v151
    %v441 = vpop.f32.mrf.mxu0
    %v442 = vadd.f32 %v197, %v441
    %v443 = vpop.f32.mrf.mxu0
    %v444 = vadd.f32 %v201, %v443
    %v445 = vpop.f32.mrf.mxu0
    %v446 = vpop.f32.mrf.mxu0
    %447 = vdwg.mxu0
    %v448 = vmax.f32 %v401, 0.0
    %v449 = vmax.f32 %v403, 0.0
    %v450 = vmax.f32 %v442, 0.0
    %v451 = vmax.f32 %v444, 0.0
    %v452 = vpack.c.bf16 %v448, %v448
    %v453 = vpack.c.bf16 %v449, %v449
    %v454 = vpack.c.bf16 %v450, %v450
    %v455 = vpack.c.bf16 %v451, %v451
    %v456 = vld [vmem:[#allocation8] sm:$0xff]
    %v457 = vld [vmem:[#allocation8 + $0x8] sm:$0xff]
    %v458 = vld [vmem:[#allocation8 + $0x10] sm:$0xff]
    %v459 = vld [vmem:[#allocation8 + $0x18] sm:$0xff]
    %v460 = vld [vmem:[#allocation8 + $0x20] sm:$0xff]
    %v461 = vld [vmem:[#allocation8 + $0x28] sm:$0xff]
    %v462 = vld [vmem:[#allocation8 + $0x30] sm:$0xff]
    %v463 = vld [vmem:[#allocation8 + $0x38] sm:$0xff]
    %v464 = vld [vmem:[#allocation8 + $0x40] sm:$0xff]
    %v465 = vld [vmem:[#allocation8 + $0x48] sm:$0xff]
    %v466 = vld [vmem:[#allocation8 + $0x50] sm:$0xff]
    %v467 = vld [vmem:[#allocation8 + $0x58] sm:$0xff]
    %v468 = vld [vmem:[#allocation8 + $0x60] sm:$0xff]
    %v469 = vld [vmem:[#allocation8 + $0x68] sm:$0xff]
    %v470 = vld [vmem:[#allocation8 + $0x70] sm:$0xff]
    %v471 = vld [vmem:[#allocation8 + $0x78] sm:$0xff]
    %v472 = vld [vmem:[#allocation8 + $0x80] sm:$0xff]
    %v473 = vld [vmem:[#allocation8 + $0x88] sm:$0xff]
    %v474 = vld [vmem:[#allocation8 + $0x90] sm:$0xff]
    %v475 = vld [vmem:[#allocation8 + $0x98] sm:$0xff]
    %v476 = vld [vmem:[#allocation8 + $0xa0] sm:$0xff]
    %v477 = vld [vmem:[#allocation8 + $0xa8] sm:$0xff]
    %v478 = vld [vmem:[#allocation8 + $0xb0] sm:$0xff]
    %v479 = vld [vmem:[#allocation8 + $0xb8] sm:$0xff]
    %v480 = vld [vmem:[#allocation8 + $0xc0] sm:$0xff]
    %v481 = vld [vmem:[#allocation8 + $0xc8] sm:$0xff]
    %v482 = vld [vmem:[#allocation8 + $0xd0] sm:$0xff]
    %v483 = vld [vmem:[#allocation8 + $0xd8] sm:$0xff]
    %v484 = vld [vmem:[#allocation8 + $0xe0] sm:$0xff]
    %v485 = vld [vmem:[#allocation8 + $0xe8] sm:$0xff]
    %v486 = vld [vmem:[#allocation8 + $0xf0] sm:$0xff]
    %v487 = vld [vmem:[#allocation8 + $0xf8] sm:$0xff]
    %v488 = vld [vmem:[#allocation8 + $0x100] sm:$0xff]
    %v489 = vld [vmem:[#allocation8 + $0x108] sm:$0xff]
    %v490 = vld [vmem:[#allocation8 + $0x110] sm:$0xff]
    %v491 = vld [vmem:[#allocation8 + $0x118] sm:$0xff]
    %v492 = vld [vmem:[#allocation8 + $0x120] sm:$0xff]
    %v493 = vld [vmem:[#allocation8 + $0x128] sm:$0xff]
    %v494 = vld [vmem:[#allocation8 + $0x130] sm:$0xff]
    %v495 = vld [vmem:[#allocation8 + $0x138] sm:$0xff]
    %v496 = vld [vmem:[#allocation8 + $0x140] sm:$0xff]
    %v497 = vld [vmem:[#allocation8 + $0x148] sm:$0xff]
    %v498 = vld [vmem:[#allocation8 + $0x150] sm:$0xff]
    %v499 = vld [vmem:[#allocation8 + $0x158] sm:$0xff]
    %v500 = vld [vmem:[#allocation8 + $0x160] sm:$0xff]
    %v501 = vld [vmem:[#allocation8 + $0x168] sm:$0xff]
    %v502 = vld [vmem:[#allocation8 + $0x170] sm:$0xff]
    %v503 = vld [vmem:[#allocation8 + $0x178] sm:$0xff]
    %v504 = vld [vmem:[#allocation8 + $0x180] sm:$0xff]
    %v505 = vld [vmem:[#allocation8 + $0x188] sm:$0xff]
    %v506 = vld [vmem:[#allocation8 + $0x190] sm:$0xff]
    %v507 = vld [vmem:[#allocation8 + $0x198] sm:$0xff]
    %v508 = vld [vmem:[#allocation8 + $0x1a0] sm:$0xff]
    %v509 = vld [vmem:[#allocation8 + $0x1a8] sm:$0xff]
    %v510 = vld [vmem:[#allocation8 + $0x1b0] sm:$0xff]
    %v511 = vld [vmem:[#allocation8 + $0x1b8] sm:$0xff]
    %v512 = vld [vmem:[#allocation8 + $0x1c0] sm:$0xff]
    %v513 = vld [vmem:[#allocation8 + $0x1c8] sm:$0xff]
    %v514 = vld [vmem:[#allocation8 + $0x1d0] sm:$0xff]
    %v515 = vld [vmem:[#allocation8 + $0x1d8] sm:$0xff]
    %v516 = vld [vmem:[#allocation8 + $0x1e0] sm:$0xff]
    %v517 = vld [vmem:[#allocation8 + $0x1e8] sm:$0xff]
    %v518 = vld [vmem:[#allocation8 + $0x1f0] sm:$0xff]
    %v519 = vld [vmem:[#allocation8 + $0x1f8] sm:$0xff]
    %v520 = vld [vmem:[%s4] sm:$0x3]
    %v522 = vlaneseq
    %v523 = vshrl.u32 %v522, 7
    %v524 = vsub.s32 0, %v523
    %v525 = vrot.slane %v520, %v524
    %v526 = vlaneseq
    %v527 = vshrl.u32 %v526, 7
    %v528 = vsub.s32 1, %v527
    %v529 = vrot.slane %v520, %v528
    %v596 = vunpack.c.l.b16 %v456
    %v597 = vunpack.c.h.b16 %v456
    %v598 = vunpack.c.l.b16 %v457
    %v599 = vunpack.c.h.b16 %v457
    %v600 = vunpack.c.l.b16 %v458
    %v601 = vunpack.c.h.b16 %v458
    %v602 = vunpack.c.l.b16 %v459
    %v603 = vunpack.c.h.b16 %v459
    %v604 = vunpack.c.l.b16 %v460
    %v605 = vunpack.c.h.b16 %v460
    %v606 = vunpack.c.l.b16 %v461
    %v607 = vunpack.c.h.b16 %v461
    %v608 = vunpack.c.l.b16 %v462
    %v609 = vunpack.c.h.b16 %v462
    %v610 = vunpack.c.l.b16 %v463
    %v611 = vunpack.c.h.b16 %v463
    %v612 = vunpack.c.l.b16 %v464
    %v613 = vunpack.c.h.b16 %v464
    %v614 = vunpack.c.l.b16 %v465
    %v615 = vunpack.c.h.b16 %v465
    %v616 = vunpack.c.l.b16 %v466
    %v617 = vunpack.c.h.b16 %v466
    %v618 = vunpack.c.l.b16 %v467
    %v619 = vunpack.c.h.b16 %v467
    %v620 = vunpack.c.l.b16 %v468
    %v621 = vunpack.c.h.b16 %v468
    %v622 = vunpack.c.l.b16 %v469
    %v623 = vunpack.c.h.b16 %v469
    %v624 = vunpack.c.l.b16 %v470
    %v625 = vunpack.c.h.b16 %v470
    %v626 = vunpack.c.l.b16 %v471
    %v627 = vunpack.c.h.b16 %v471
    %v628 = vunpack.c.l.b16 %v472
    %v629 = vunpack.c.h.b16 %v472
    %v630 = vunpack.c.l.b16 %v473
    %v631 = vunpack.c.h.b16 %v473
    %v632 = vunpack.c.l.b16 %v474
    %v633 = vunpack.c.h.b16 %v474
    %v634 = vunpack.c.l.b16 %v475
    %v635 = vunpack.c.h.b16 %v475
    %v636 = vunpack.c.l.b16 %v476
    %v637 = vunpack.c.h.b16 %v476
    %v638 = vunpack.c.l.b16 %v477
    %v639 = vunpack.c.h.b16 %v477
    %v640 = vunpack.c.l.b16 %v478
    %v641 = vunpack.c.h.b16 %v478
    %v642 = vunpack.c.l.b16 %v479
    %v643 = vunpack.c.h.b16 %v479
    %v644 = vunpack.c.l.b16 %v480
    %v645 = vunpack.c.h.b16 %v480
    %v646 = vunpack.c.l.b16 %v481
    %v647 = vunpack.c.h.b16 %v481
    %v648 = vunpack.c.l.b16 %v482
    %v649 = vunpack.c.h.b16 %v482
    %v650 = vunpack.c.l.b16 %v483
    %v651 = vunpack.c.h.b16 %v483
    %v652 = vunpack.c.l.b16 %v484
    %v653 = vunpack.c.h.b16 %v484
    %v654 = vunpack.c.l.b16 %v485
    %v655 = vunpack.c.h.b16 %v485
    %v656 = vunpack.c.l.b16 %v486
    %v657 = vunpack.c.h.b16 %v486
    %v658 = vunpack.c.l.b16 %v487
    %v659 = vunpack.c.h.b16 %v487
    %v660 = vunpack.c.l.b16 %v488
    %v661 = vunpack.c.h.b16 %v488
    %v662 = vunpack.c.l.b16 %v489
    %v663 = vunpack.c.h.b16 %v489
    %v664 = vunpack.c.l.b16 %v490
    %v665 = vunpack.c.h.b16 %v490
    %v666 = vunpack.c.l.b16 %v491
    %v667 = vunpack.c.h.b16 %v491
    %v668 = vunpack.c.l.b16 %v492
    %v669 = vunpack.c.h.b16 %v492
    %v670 = vunpack.c.l.b16 %v493
    %v671 = vunpack.c.h.b16 %v493
    %v672 = vunpack.c.l.b16 %v494
    %v673 = vunpack.c.h.b16 %v494
    %v674 = vunpack.c.l.b16 %v495
    %v675 = vunpack.c.h.b16 %v495
    %v676 = vunpack.c.l.b16 %v496
    %v677 = vunpack.c.h.b16 %v496
    %v678 = vunpack.c.l.b16 %v497
    %v679 = vunpack.c.h.b16 %v497
    %v680 = vunpack.c.l.b16 %v498
    %v681 = vunpack.c.h.b16 %v498
    %v682 = vunpack.c.l.b16 %v499
    %v683 = vunpack.c.h.b16 %v499
    %v684 = vunpack.c.l.b16 %v500
    %v685 = vunpack.c.h.b16 %v500
    %v686 = vunpack.c.l.b16 %v501
    %v687 = vunpack.c.h.b16 %v501
    %v688 = vunpack.c.l.b16 %v502
    %v689 = vunpack.c.h.b16 %v502
    %v690 = vunpack.c.l.b16 %v503
    %v691 = vunpack.c.h.b16 %v503
    %v692 = vunpack.c.l.b16 %v504
    %v693 = vunpack.c.h.b16 %v504
    %v694 = vunpack.c.l.b16 %v505
    %v695 = vunpack.c.h.b16 %v505
    %v696 = vunpack.c.l.b16 %v506
    %v697 = vunpack.c.h.b16 %v506
    %v698 = vunpack.c.l.b16 %v507
    %v699 = vunpack.c.h.b16 %v507
    %v700 = vunpack.c.l.b16 %v508
    %v701 = vunpack.c.h.b16 %v508
    %v702 = vunpack.c.l.b16 %v509
    %v703 = vunpack.c.h.b16 %v509
    %v704 = vunpack.c.l.b16 %v510
    %v705 = vunpack.c.h.b16 %v510
    %v706 = vunpack.c.l.b16 %v511
    %v707 = vunpack.c.h.b16 %v511
    %v708 = vunpack.c.l.b16 %v512
    %v709 = vunpack.c.h.b16 %v512
    %v710 = vunpack.c.l.b16 %v513
    %v711 = vunpack.c.h.b16 %v513
    %v712 = vunpack.c.l.b16 %v514
    %v713 = vunpack.c.h.b16 %v514
    %v714 = vunpack.c.l.b16 %v515
    %v715 = vunpack.c.h.b16 %v515
    %v716 = vunpack.c.l.b16 %v516
    %v717 = vunpack.c.h.b16 %v516
    %v718 = vunpack.c.l.b16 %v517
    %v719 = vunpack.c.h.b16 %v517
    %v720 = vunpack.c.l.b16 %v518
    %v721 = vunpack.c.h.b16 %v518
    %v722 = vunpack.c.l.b16 %v519
    %v723 = vunpack.c.h.b16 %v519
    %v724 = vpack.c.b16 %v598, %v596
    %v725 = vpack.c.b16 %v599, %v597
    %v726 = vpack.c.b16 %v602, %v600
    %v727 = vpack.c.b16 %v603, %v601
    %v728 = vpack.c.b16 %v606, %v604
    %v729 = vpack.c.b16 %v607, %v605
    %v730 = vpack.c.b16 %v610, %v608
    %v731 = vpack.c.b16 %v611, %v609
    %v732 = vpack.c.b16 %v614, %v612
    %v733 = vpack.c.b16 %v615, %v613
    %v734 = vpack.c.b16 %v618, %v616
    %v735 = vpack.c.b16 %v619, %v617
    %v736 = vpack.c.b16 %v622, %v620
    %v737 = vpack.c.b16 %v623, %v621
    %v738 = vpack.c.b16 %v626, %v624
    %v739 = vpack.c.b16 %v627, %v625
    %v740 = vpack.c.b16 %v630, %v628
    %v741 = vpack.c.b16 %v631, %v629
    %v742 = vpack.c.b16 %v634, %v632
    %v743 = vpack.c.b16 %v635, %v633
    %v744 = vpack.c.b16 %v638, %v636
    %v745 = vpack.c.b16 %v639, %v637
    %v746 = vpack.c.b16 %v642, %v640
    %v747 = vpack.c.b16 %v643, %v641
    %v748 = vpack.c.b16 %v646, %v644
    %v749 = vpack.c.b16 %v647, %v645
    %v750 = vpack.c.b16 %v650, %v648
    %v751 = vpack.c.b16 %v651, %v649
    %v752 = vpack.c.b16 %v654, %v652
    %v753 = vpack.c.b16 %v655, %v653
    %v754 = vpack.c.b16 %v658, %v656
    %v755 = vpack.c.b16 %v659, %v657
    %v756 = vpack.c.b16 %v662, %v660
    %v757 = vpack.c.b16 %v663, %v661
    %v758 = vpack.c.b16 %v666, %v664
    %v759 = vpack.c.b16 %v667, %v665
    %v760 = vpack.c.b16 %v670, %v668
    %v761 = vpack.c.b16 %v671, %v669
    %v762 = vpack.c.b16 %v674, %v672
    %v763 = vpack.c.b16 %v675, %v673
    %v764 = vpack.c.b16 %v678, %v676
    %v765 = vpack.c.b16 %v679, %v677
    %v766 = vpack.c.b16 %v682, %v680
    %v767 = vpack.c.b16 %v683, %v681
    %v768 = vpack.c.b16 %v686, %v684
    %v769 = vpack.c.b16 %v687, %v685
    %v770 = vpack.c.b16 %v690, %v688
    %v771 = vpack.c.b16 %v691, %v689
    %v772 = vpack.c.b16 %v694, %v692
    %v773 = vpack.c.b16 %v695, %v693
    %v774 = vpack.c.b16 %v698, %v696
    %v775 = vpack.c.b16 %v699, %v697
    %v776 = vpack.c.b16 %v702, %v700
    %v777 = vpack.c.b16 %v703, %v701
    %v778 = vpack.c.b16 %v706, %v704
    %v779 = vpack.c.b16 %v707, %v705
    %v780 = vpack.c.b16 %v710, %v708
    %v781 = vpack.c.b16 %v711, %v709
    %v782 = vpack.c.b16 %v714, %v712
    %v783 = vpack.c.b16 %v715, %v713
    %v784 = vpack.c.b16 %v718, %v716
    %v785 = vpack.c.b16 %v719, %v717
    %v786 = vpack.c.b16 %v722, %v720
    %v787 = vpack.c.b16 %v723, %v721
    %852 = vmatprep.subr.bf16.mxu0 %v739
    %853 = vmatpush1.bf16.msra.mxu0 %v738
    %854 = vmatprep.subr.bf16.mxu0 %v737
    %855 = vmatpush1.bf16.msra.mxu0 %v736
    %856 = vmatprep.subr.bf16.mxu0 %v735
    %857 = vmatpush1.bf16.msra.mxu0 %v734
    %858 = vmatprep.subr.bf16.mxu0 %v733
    %859 = vmatpush1.bf16.msra.mxu0 %v732
    %860 = vmatprep.subr.bf16.mxu0 %v731
    %861 = vmatpush1.bf16.msra.mxu0 %v730
    %862 = vmatprep.subr.bf16.mxu0 %v729
    %863 = vmatpush1.bf16.msra.mxu0 %v728
    %864 = vmatprep.subr.bf16.mxu0 %v727
    %865 = vmatpush1.bf16.msra.mxu0 %v726
    %866 = vmatprep.subr.bf16.mxu0 %v725
    %867 = vmatpush1.bf16.msra.mxu0 %v724
    %868 = vmatprep.subr.bf16.mxu0 %v755
    %869 = vmatpush2.bf16.msra.mxu0 %v754
    %870 = vmatprep.subr.bf16.mxu0 %v753
    %871 = vmatpush2.bf16.msra.mxu0 %v752
    %872 = vmatprep.subr.bf16.mxu0 %v751
    %873 = vmatpush2.bf16.msra.mxu0 %v750
    %874 = vmatprep.subr.bf16.mxu0 %v749
    %875 = vmatpush2.bf16.msra.mxu0 %v748
    %876 = vmatprep.subr.bf16.mxu0 %v747
    %877 = vmatpush2.bf16.msra.mxu0 %v746
    %878 = vmatprep.subr.bf16.mxu0 %v745
    %879 = vmatpush2.bf16.msra.mxu0 %v744
    %880 = vmatprep.subr.bf16.mxu0 %v743
    %881 = vmatpush2.bf16.msra.mxu0 %v742
    %882 = vmatprep.subr.bf16.mxu0 %v741
    %883 = vmatpush2.bf16.msra.mxu0 %v740
    %884 = vmatprep.mubr.bf16.mxu0 %v453
    %885 = vmatmul.mubr.bf16.gmra.mxu0 %v452
    %v886 = vpop.f32.mrf.mxu0
    %v887 = vadd.f32 %v525, %v886
    %v888 = vpop.f32.mrf.mxu0
    %v889 = vadd.f32 %v529, %v888
    %v890 = vpop.f32.mrf.mxu0
    %v891 = vpop.f32.mrf.mxu0
    %892 = vdwg.mxu0
    %893 = vmatprep.subr.bf16.mxu0 %v771
    %894 = vmatpush1.bf16.msra.mxu0 %v770
    %895 = vmatprep.subr.bf16.mxu0 %v769
    %896 = vmatpush1.bf16.msra.mxu0 %v768
    %897 = vmatprep.subr.bf16.mxu0 %v767
    %898 = vmatpush1.bf16.msra.mxu0 %v766
    %899 = vmatprep.subr.bf16.mxu0 %v765
    %900 = vmatpush1.bf16.msra.mxu0 %v764
    %901 = vmatprep.subr.bf16.mxu0 %v763
    %902 = vmatpush1.bf16.msra.mxu0 %v762
    %903 = vmatprep.subr.bf16.mxu0 %v761
    %904 = vmatpush1.bf16.msra.mxu0 %v760
    %905 = vmatprep.subr.bf16.mxu0 %v759
    %906 = vmatpush1.bf16.msra.mxu0 %v758
    %907 = vmatprep.subr.bf16.mxu0 %v757
    %908 = vmatpush1.bf16.msra.mxu0 %v756
    %909 = vmatprep.subr.bf16.mxu0 %v787
    %910 = vmatpush2.bf16.msra.mxu0 %v786
    %911 = vmatprep.subr.bf16.mxu0 %v785
    %912 = vmatpush2.bf16.msra.mxu0 %v784
    %913 = vmatprep.subr.bf16.mxu0 %v783
    %914 = vmatpush2.bf16.msra.mxu0 %v782
    %915 = vmatprep.subr.bf16.mxu0 %v781
    %916 = vmatpush2.bf16.msra.mxu0 %v780
    %917 = vmatprep.subr.bf16.mxu0 %v779
    %918 = vmatpush2.bf16.msra.mxu0 %v778
    %919 = vmatprep.subr.bf16.mxu0 %v777
    %920 = vmatpush2.bf16.msra.mxu0 %v776
    %921 = vmatprep.subr.bf16.mxu0 %v775
    %922 = vmatpush2.bf16.msra.mxu0 %v774
    %923 = vmatprep.subr.bf16.mxu0 %v773
    %924 = vmatpush2.bf16.msra.mxu0 %v772
    %925 = vmatprep.mubr.bf16.mxu0 %v455
    %926 = vmatmul.mubr.bf16.gmra.mxu0 %v454
    %v927 = vpop.f32.mrf.mxu0
    %v928 = vadd.f32 %v887, %v927
    %v929 = vpop.f32.mrf.mxu0
    %v930 = vadd.f32 %v889, %v929
    %v931 = vpop.f32.mrf.mxu0
    %v932 = vpop.f32.mrf.mxu0
    %933 = vdwg.mxu0
    %v934 = vmax.f32 %v928, 0.0
    %v935 = vmax.f32 %v930, 0.0
    %v936 = vpack.c.bf16 %v934, %v934
    %v937 = vpack.c.bf16 %v935, %v935
    %v938 = vld [vmem:[#allocation10] sm:$0xf]
    %v939 = vld [vmem:[#allocation10 + $0x4] sm:$0xf]
    %v940 = vld [vmem:[#allocation10 + $0x8] sm:$0xf]
    %v941 = vld [vmem:[#allocation10 + $0xc] sm:$0xf]
    %v942 = vld [vmem:[#allocation10 + $0x10] sm:$0xf]
    %v943 = vld [vmem:[#allocation10 + $0x14] sm:$0xf]
    %v944 = vld [vmem:[#allocation10 + $0x18] sm:$0xf]
    %v945 = vld [vmem:[#allocation10 + $0x1c] sm:$0xf]
    %v946 = vld [vmem:[#allocation10 + $0x20] sm:$0xf]
    %v947 = vld [vmem:[#allocation10 + $0x24] sm:$0xf]
    %v948 = vld [vmem:[#allocation10 + $0x28] sm:$0xf]
    %v949 = vld [vmem:[#allocation10 + $0x2c] sm:$0xf]
    %v950 = vld [vmem:[#allocation10 + $0x30] sm:$0xf]
    %v951 = vld [vmem:[#allocation10 + $0x34] sm:$0xf]
    %v952 = vld [vmem:[#allocation10 + $0x38] sm:$0xf]
    %v953 = vld [vmem:[#allocation10 + $0x3c] sm:$0xf]
    %v954 = vld [vmem:[#allocation10 + $0x40] sm:$0xf]
    %v955 = vld [vmem:[#allocation10 + $0x44] sm:$0xf]
    %v956 = vld [vmem:[#allocation10 + $0x48] sm:$0xf]
    %v957 = vld [vmem:[#allocation10 + $0x4c] sm:$0xf]
    %v958 = vld [vmem:[#allocation10 + $0x50] sm:$0xf]
    %v959 = vld [vmem:[#allocation10 + $0x54] sm:$0xf]
    %v960 = vld [vmem:[#allocation10 + $0x58] sm:$0xf]
    %v961 = vld [vmem:[#allocation10 + $0x5c] sm:$0xf]
    %v962 = vld [vmem:[#allocation10 + $0x60] sm:$0xf]
    %v963 = vld [vmem:[#allocation10 + $0x64] sm:$0xf]
    %v964 = vld [vmem:[#allocation10 + $0x68] sm:$0xf]
    %v965 = vld [vmem:[#allocation10 + $0x6c] sm:$0xf]
    %v966 = vld [vmem:[#allocation10 + $0x70] sm:$0xf]
    %v967 = vld [vmem:[#allocation10 + $0x74] sm:$0xf]
    %v968 = vld [vmem:[#allocation10 + $0x78] sm:$0xf]
    %v969 = vld [vmem:[#allocation10 + $0x7c] sm:$0xf]
    %v970 = vld [vmem:[%s6] sm:$0x1]
    %v972 = vlaneseq
    %v973 = vshrl.u32 %v972, 7
    %v974 = vsub.s32 0, %v973
    %v975 = vrot.slane %v970, %v974
    %v1009 = vunpack.c.l.b16 %v938
    %v1010 = vunpack.c.l.b16 %v939
    %v1011 = vunpack.c.l.b16 %v940
    %v1012 = vunpack.c.l.b16 %v941
    %v1013 = vunpack.c.l.b16 %v942
    %v1014 = vunpack.c.l.b16 %v943
    %v1015 = vunpack.c.l.b16 %v944
    %v1016 = vunpack.c.l.b16 %v945
    %v1017 = vunpack.c.l.b16 %v946
    %v1018 = vunpack.c.l.b16 %v947
    %v1019 = vunpack.c.l.b16 %v948
    %v1020 = vunpack.c.l.b16 %v949
    %v1021 = vunpack.c.l.b16 %v950
    %v1022 = vunpack.c.l.b16 %v951
    %v1023 = vunpack.c.l.b16 %v952
    %v1024 = vunpack.c.l.b16 %v953
    %v1025 = vunpack.c.l.b16 %v954
    %v1026 = vunpack.c.l.b16 %v955
    %v1027 = vunpack.c.l.b16 %v956
    %v1028 = vunpack.c.l.b16 %v957
    %v1029 = vunpack.c.l.b16 %v958
    %v1030 = vunpack.c.l.b16 %v959
    %v1031 = vunpack.c.l.b16 %v960
    %v1032 = vunpack.c.l.b16 %v961
    %v1033 = vunpack.c.l.b16 %v962
    %v1034 = vunpack.c.l.b16 %v963
    %v1035 = vunpack.c.l.b16 %v964
    %v1036 = vunpack.c.l.b16 %v965
    %v1037 = vunpack.c.l.b16 %v966
    %v1038 = vunpack.c.l.b16 %v967
    %v1039 = vunpack.c.l.b16 %v968
    %v1040 = vunpack.c.l.b16 %v969
    %v1041 = vpack.c.b16 %v1010, %v1009
    %v1042 = vpack.c.b16 %v1012, %v1011
    %v1043 = vpack.c.b16 %v1014, %v1013
    %v1044 = vpack.c.b16 %v1016, %v1015
    %v1045 = vpack.c.b16 %v1018, %v1017
    %v1046 = vpack.c.b16 %v1020, %v1019
    %v1047 = vpack.c.b16 %v1022, %v1021
    %v1048 = vpack.c.b16 %v1024, %v1023
    %v1049 = vpack.c.b16 %v1026, %v1025
    %v1050 = vpack.c.b16 %v1028, %v1027
    %v1051 = vpack.c.b16 %v1030, %v1029
    %v1052 = vpack.c.b16 %v1032, %v1031
    %v1053 = vpack.c.b16 %v1034, %v1033
    %v1054 = vpack.c.b16 %v1036, %v1035
    %v1055 = vpack.c.b16 %v1038, %v1037
    %v1056 = vpack.c.b16 %v1040, %v1039
    %1073 = vmatprep.subr.bf16.mxu0 0
    %1074 = vmatpush1.bf16.msra.mxu0 %v1048
    %1075 = vmatprep.subr.bf16.mxu0 0
    %1076 = vmatpush1.bf16.msra.mxu0 %v1047
    %1077 = vmatprep.subr.bf16.mxu0 0
    %1078 = vmatpush1.bf16.msra.mxu0 %v1046
    %1079 = vmatprep.subr.bf16.mxu0 0
    %1080 = vmatpush1.bf16.msra.mxu0 %v1045
    %1081 = vmatprep.subr.bf16.mxu0 0
    %1082 = vmatpush1.bf16.msra.mxu0 %v1044
    %1083 = vmatprep.subr.bf16.mxu0 0
    %1084 = vmatpush1.bf16.msra.mxu0 %v1043
    %1085 = vmatprep.subr.bf16.mxu0 0
    %1086 = vmatpush1.bf16.msra.mxu0 %v1042
    %1087 = vmatprep.subr.bf16.mxu0 0
    %1088 = vmatpush1.bf16.msra.mxu0 %v1041
    %1089 = vmatprep.subr.bf16.mxu0 0
    %1090 = vmatpush2.bf16.msra.mxu0 %v1056
    %1091 = vmatprep.subr.bf16.mxu0 0
    %1092 = vmatpush2.bf16.msra.mxu0 %v1055
    %1093 = vmatprep.subr.bf16.mxu0 0
    %1094 = vmatpush2.bf16.msra.mxu0 %v1054
    %1095 = vmatprep.subr.bf16.mxu0 0
    %1096 = vmatpush2.bf16.msra.mxu0 %v1053
    %1097 = vmatprep.subr.bf16.mxu0 0
    %1098 = vmatpush2.bf16.msra.mxu0 %v1052
    %1099 = vmatprep.subr.bf16.mxu0 0
    %1100 = vmatpush2.bf16.msra.mxu0 %v1051
    %1101 = vmatprep.subr.bf16.mxu0 0
    %1102 = vmatpush2.bf16.msra.mxu0 %v1050
    %1103 = vmatprep.subr.bf16.mxu0 0
    %1104 = vmatpush2.bf16.msra.mxu0 %v1049
    %1105 = vmatprep.mubr.bf16.mxu0 %v937
    %1106 = vmatmul.mubr.bf16.gmra.mxu0 %v936
    %v1107 = vpop.f32.mrf.mxu0
    %v1108 = vadd.f32 %v975, %v1107
    %v1109 = vpop.f32.mrf.mxu0
    %v1110 = vpop.f32.mrf.mxu0
    %v1111 = vpop.f32.mrf.mxu0
    %1112 = vdwg.mxu0
    %v1113 = vmax.f32 %v1108, 0.0
    %v1114 = vpack.c.bf16 %v1113, %v1113
    %v1115 = vld [vmem:[#allocation11] sm:$0xf]
    %v1116 = vld [vmem:[#allocation11 + $0x4] sm:$0xf]
    %v1117 = vld [vmem:[#allocation11 + $0x8] sm:$0xf]
    %v1118 = vld [vmem:[#allocation11 + $0xc] sm:$0xf]
    %v1119 = vld [vmem:[#allocation11 + $0x10] sm:$0xf]
    %v1120 = vld [vmem:[#allocation11 + $0x14] sm:$0xf]
    %v1121 = vld [vmem:[#allocation11 + $0x18] sm:$0xf]
    %v1122 = vld [vmem:[#allocation11 + $0x1c] sm:$0xf]
    %v1123 = vld [vmem:[#allocation11 + $0x20] sm:$0xf]
    %v1124 = vld [vmem:[#allocation11 + $0x24] sm:$0xf]
    %v1125 = vld [vmem:[#allocation11 + $0x28] sm:$0xf]
    %v1126 = vld [vmem:[#allocation11 + $0x2c] sm:$0xf]
    %v1127 = vld [vmem:[#allocation11 + $0x30] sm:$0xf]
    %v1128 = vld [vmem:[#allocation11 + $0x34] sm:$0xf]
    %v1129 = vld [vmem:[#allocation11 + $0x38] sm:$0xf]
    %v1130 = vld [vmem:[#allocation11 + $0x3c] sm:$0xf]
    %v1131 = vld [vmem:[%s8] sm:$0x1]
    %v1133 = vlaneseq
    %v1134 = vshrl.u32 %v1133, 7
    %v1135 = vsub.s32 0, %v1134
    %v1136 = vrot.slane %v1131, %v1135
    %v1154 = vunpack.c.l.b16 %v1115
    %v1155 = vunpack.c.l.b16 %v1116
    %v1156 = vunpack.c.l.b16 %v1117
    %v1157 = vunpack.c.l.b16 %v1118
    %v1158 = vunpack.c.l.b16 %v1119
    %v1159 = vunpack.c.l.b16 %v1120
    %v1160 = vunpack.c.l.b16 %v1121
    %v1161 = vunpack.c.l.b16 %v1122
    %v1162 = vunpack.c.l.b16 %v1123
    %v1163 = vunpack.c.l.b16 %v1124
    %v1164 = vunpack.c.l.b16 %v1125
    %v1165 = vunpack.c.l.b16 %v1126
    %v1166 = vunpack.c.l.b16 %v1127
    %v1167 = vunpack.c.l.b16 %v1128
    %v1168 = vunpack.c.l.b16 %v1129
    %v1169 = vunpack.c.l.b16 %v1130
    %v1170 = vpack.c.b16 %v1155, %v1154
    %v1171 = vpack.c.b16 %v1157, %v1156
    %v1172 = vpack.c.b16 %v1159, %v1158
    %v1173 = vpack.c.b16 %v1161, %v1160
    %v1174 = vpack.c.b16 %v1163, %v1162
    %v1175 = vpack.c.b16 %v1165, %v1164
    %v1176 = vpack.c.b16 %v1167, %v1166
    %v1177 = vpack.c.b16 %v1169, %v1168
    %1186 = vmatprep.subr.bf16.mxu0 0
    %1187 = vmatpush1.bf16.msra.mxu0 %v1177
    %1188 = vmatprep.subr.bf16.mxu0 0
    %1189 = vmatpush1.bf16.msra.mxu0 %v1176
    %1190 = vmatprep.subr.bf16.mxu0 0
    %1191 = vmatpush1.bf16.msra.mxu0 %v1175
    %1192 = vmatprep.subr.bf16.mxu0 0
    %1193 = vmatpush1.bf16.msra.mxu0 %v1174
    %1194 = vmatprep.subr.bf16.mxu0 0
    %1195 = vmatpush1.bf16.msra.mxu0 %v1173
    %1196 = vmatprep.subr.bf16.mxu0 0
    %1197 = vmatpush1.bf16.msra.mxu0 %v1172
    %1198 = vmatprep.subr.bf16.mxu0 0
    %1199 = vmatpush1.bf16.msra.mxu0 %v1171
    %1200 = vmatprep.subr.bf16.mxu0 0
    %1201 = vmatpush1.bf16.msra.mxu0 %v1170
    %1202 = vmatprep.subr.bf16.mxu0 0
    %1203 = vmatpush2.bf16.msra.mxu0 0
    %1204 = vmatprep.subr.bf16.mxu0 0
    %1205 = vmatpush2.bf16.msra.mxu0 0
    %1206 = vmatprep.subr.bf16.mxu0 0
    %1207 = vmatpush2.bf16.msra.mxu0 0
    %1208 = vmatprep.subr.bf16.mxu0 0
    %1209 = vmatpush2.bf16.msra.mxu0 0
    %1210 = vmatprep.subr.bf16.mxu0 0
    %1211 = vmatpush2.bf16.msra.mxu0 0
    %1212 = vmatprep.subr.bf16.mxu0 0
    %1213 = vmatpush2.bf16.msra.mxu0 0
    %1214 = vmatprep.subr.bf16.mxu0 0
    %1215 = vmatpush2.bf16.msra.mxu0 0
    %1216 = vmatprep.subr.bf16.mxu0 0
    %1217 = vmatpush2.bf16.msra.mxu0 0
    %1218 = vmatprep.mubr.bf16.mxu0 0
    %1219 = vmatmul.mubr.bf16.gmra.mxu0 %v1114
    %v1220 = vpop.f32.mrf.mxu0
    %v1221 = vadd.f32 %v1136, %v1220
    %v1222 = vpop.f32.mrf.mxu0
    %v1223 = vpop.f32.mrf.mxu0
    %v1224 = vpop.f32.mrf.mxu0
    %1225 = vdwg.mxu0
    %v1226 = vmax.f32 %v1221, 0.0
    %v1227 = vpack.c.bf16 %v1226, %v1226
    %v1228 = vld [vmem:[#allocation13] sm:$0xf]
    %v1229 = vld [vmem:[#allocation13 + $0x4] sm:$0xf]
    %v1230 = vld [vmem:[#allocation13 + $0x8] sm:$0xf]
    %v1231 = vld [vmem:[#allocation13 + $0xc] sm:$0xf]
    %v1232 = vld [vmem:[#allocation13 + $0x10] sm:$0xf]
    %v1233 = vld [vmem:[#allocation13 + $0x14] sm:$0xf]
    %v1234 = vld [vmem:[#allocation13 + $0x18] sm:$0xf]
    %v1235 = vld [vmem:[#allocation13 + $0x1c] sm:$0xf]
    %v1236 = vld [vmem:[#allocation13 + $0x20] sm:$0xf]
    %v1237 = vld [vmem:[#allocation13 + $0x24] sm:$0xf]
    %v1238 = vld [vmem:[#allocation13 + $0x28] sm:$0xf]
    %v1239 = vld [vmem:[#allocation13 + $0x2c] sm:$0xf]
    %v1240 = vld [vmem:[#allocation13 + $0x30] sm:$0xf]
    %v1241 = vld [vmem:[#allocation13 + $0x34] sm:$0xf]
    %v1242 = vld [vmem:[#allocation13 + $0x38] sm:$0xf]
    %v1243 = vld [vmem:[#allocation13 + $0x3c] sm:$0xf]
    %v1244 = vld [vmem:[%s10] sm:$0x1]
    %v1246 = vlaneseq
    %v1247 = vshrl.u32 %v1246, 7
    %v1248 = vsub.s32 0, %v1247
    %v1249 = vrot.slane %v1244, %v1248
    %v1267 = vunpack.c.l.b16 %v1228
    %v1268 = vunpack.c.l.b16 %v1229
    %v1269 = vunpack.c.l.b16 %v1230
    %v1270 = vunpack.c.l.b16 %v1231
    %v1271 = vunpack.c.l.b16 %v1232
    %v1272 = vunpack.c.l.b16 %v1233
    %v1273 = vunpack.c.l.b16 %v1234
    %v1274 = vunpack.c.l.b16 %v1235
    %v1275 = vunpack.c.l.b16 %v1236
    %v1276 = vunpack.c.l.b16 %v1237
    %v1277 = vunpack.c.l.b16 %v1238
    %v1278 = vunpack.c.l.b16 %v1239
    %v1279 = vunpack.c.l.b16 %v1240
    %v1280 = vunpack.c.l.b16 %v1241
    %v1281 = vunpack.c.l.b16 %v1242
    %v1282 = vunpack.c.l.b16 %v1243
    %v1283 = vpack.c.b16 %v1268, %v1267
    %v1284 = vpack.c.b16 %v1270, %v1269
    %v1285 = vpack.c.b16 %v1272, %v1271
    %v1286 = vpack.c.b16 %v1274, %v1273
    %v1287 = vpack.c.b16 %v1276, %v1275
    %v1288 = vpack.c.b16 %v1278, %v1277
    %v1289 = vpack.c.b16 %v1280, %v1279
    %v1290 = vpack.c.b16 %v1282, %v1281
    %1299 = vmatprep.subr.bf16.mxu0 0
    %1300 = vmatpush1.bf16.msra.mxu0 %v1290
    %1301 = vmatprep.subr.bf16.mxu0 0
    %1302 = vmatpush1.bf16.msra.mxu0 %v1289
    %1303 = vmatprep.subr.bf16.mxu0 0
    %1304 = vmatpush1.bf16.msra.mxu0 %v1288
    %1305 = vmatprep.subr.bf16.mxu0 0
    %1306 = vmatpush1.bf16.msra.mxu0 %v1287
    %1307 = vmatprep.subr.bf16.mxu0 0
    %1308 = vmatpush1.bf16.msra.mxu0 %v1286
    %1309 = vmatprep.subr.bf16.mxu0 0
    %1310 = vmatpush1.bf16.msra.mxu0 %v1285
    %1311 = vmatprep.subr.bf16.mxu0 0
    %1312 = vmatpush1.bf16.msra.mxu0 %v1284
    %1313 = vmatprep.subr.bf16.mxu0 0
    %1314 = vmatpush1.bf16.msra.mxu0 %v1283
    %1315 = vmatprep.subr.bf16.mxu0 0
    %1316 = vmatpush2.bf16.msra.mxu0 0
    %1317 = vmatprep.subr.bf16.mxu0 0
    %1318 = vmatpush2.bf16.msra.mxu0 0
    %1319 = vmatprep.subr.bf16.mxu0 0
    %1320 = vmatpush2.bf16.msra.mxu0 0
    %1321 = vmatprep.subr.bf16.mxu0 0
    %1322 = vmatpush2.bf16.msra.mxu0 0
    %1323 = vmatprep.subr.bf16.mxu0 0
    %1324 = vmatpush2.bf16.msra.mxu0 0
    %1325 = vmatprep.subr.bf16.mxu0 0
    %1326 = vmatpush2.bf16.msra.mxu0 0
    %1327 = vmatprep.subr.bf16.mxu0 0
    %1328 = vmatpush2.bf16.msra.mxu0 0
    %1329 = vmatprep.subr.bf16.mxu0 0
    %1330 = vmatpush2.bf16.msra.mxu0 0
    %1331 = vmatprep.mubr.bf16.mxu0 0
    %1332 = vmatmul.mubr.bf16.gmra.mxu0 %v1227
    %v1333 = vpop.f32.mrf.mxu0
    %v1334 = vadd.f32 %v1249, %v1333
    %v1335 = vpop.f32.mrf.mxu0
    %v1336 = vpop.f32.mrf.mxu0
    %v1337 = vpop.f32.mrf.mxu0
    %1338 = vdwg.mxu0
    %v1339 = vmax.f32 %v1334, 0.0
    %v1340 = vpack.c.bf16 %v1339, %v1339
    %v1341 = vld [vmem:[#allocation14] sm:$0xf]
    %v1342 = vld [vmem:[#allocation14 + $0x4] sm:$0xf]
    %v1343 = vld [vmem:[#allocation14 + $0x8] sm:$0xf]
    %v1344 = vld [vmem:[#allocation14 + $0xc] sm:$0xf]
    %v1345 = vld [vmem:[#allocation14 + $0x10] sm:$0xf]
    %v1346 = vld [vmem:[#allocation14 + $0x14] sm:$0xf]
    %v1347 = vld [vmem:[#allocation14 + $0x18] sm:$0xf]
    %v1348 = vld [vmem:[#allocation14 + $0x1c] sm:$0xf]
    %v1349 = vld [vmem:[#allocation14 + $0x20] sm:$0xf]
    %v1350 = vld [vmem:[#allocation14 + $0x24] sm:$0xf]
    %v1351 = vld [vmem:[#allocation14 + $0x28] sm:$0xf]
    %v1352 = vld [vmem:[#allocation14 + $0x2c] sm:$0xf]
    %v1353 = vld [vmem:[#allocation14 + $0x30] sm:$0xf]
    %v1354 = vld [vmem:[#allocation14 + $0x34] sm:$0xf]
    %v1355 = vld [vmem:[#allocation14 + $0x38] sm:$0xf]
    %v1356 = vld [vmem:[#allocation14 + $0x3c] sm:$0xf]
    %v1357 = vld [vmem:[%s12] sm:$0x1]
    %v1359 = vlaneseq
    %v1360 = vshrl.u32 %v1359, 7
    %v1361 = vsub.s32 0, %v1360
    %v1362 = vrot.slane %v1357, %v1361
    %v1380 = vunpack.c.l.b16 %v1341
    %v1381 = vunpack.c.l.b16 %v1342
    %v1382 = vunpack.c.l.b16 %v1343
    %v1383 = vunpack.c.l.b16 %v1344
    %v1384 = vunpack.c.l.b16 %v1345
    %v1385 = vunpack.c.l.b16 %v1346
    %v1386 = vunpack.c.l.b16 %v1347
    %v1387 = vunpack.c.l.b16 %v1348
    %v1388 = vunpack.c.l.b16 %v1349
    %v1389 = vunpack.c.l.b16 %v1350
    %v1390 = vunpack.c.l.b16 %v1351
    %v1391 = vunpack.c.l.b16 %v1352
    %v1392 = vunpack.c.l.b16 %v1353
    %v1393 = vunpack.c.l.b16 %v1354
    %v1394 = vunpack.c.l.b16 %v1355
    %v1395 = vunpack.c.l.b16 %v1356
    %v1396 = vpack.c.b16 %v1381, %v1380
    %v1397 = vpack.c.b16 %v1383, %v1382
    %v1398 = vpack.c.b16 %v1385, %v1384
    %v1399 = vpack.c.b16 %v1387, %v1386
    %v1400 = vpack.c.b16 %v1389, %v1388
    %v1401 = vpack.c.b16 %v1391, %v1390
    %v1402 = vpack.c.b16 %v1393, %v1392
    %v1403 = vpack.c.b16 %v1395, %v1394
    %1412 = vmatprep.subr.bf16.mxu0 0
    %1413 = vmatpush1.bf16.msra.mxu0 %v1403
    %1414 = vmatprep.subr.bf16.mxu0 0
    %1415 = vmatpush1.bf16.msra.mxu0 %v1402
    %1416 = vmatprep.subr.bf16.mxu0 0
    %1417 = vmatpush1.bf16.msra.mxu0 %v1401
    %1418 = vmatprep.subr.bf16.mxu0 0
    %1419 = vmatpush1.bf16.msra.mxu0 %v1400
    %1420 = vmatprep.subr.bf16.mxu0 0
    %1421 = vmatpush1.bf16.msra.mxu0 %v1399
    %1422 = vmatprep.subr.bf16.mxu0 0
    %1423 = vmatpush1.bf16.msra.mxu0 %v1398
    %1424 = vmatprep.subr.bf16.mxu0 0
    %1425 = vmatpush1.bf16.msra.mxu0 %v1397
    %1426 = vmatprep.subr.bf16.mxu0 0
    %1427 = vmatpush1.bf16.msra.mxu0 %v1396
    %1428 = vmatprep.subr.bf16.mxu0 0
    %1429 = vmatpush2.bf16.msra.mxu0 0
    %1430 = vmatprep.subr.bf16.mxu0 0
    %1431 = vmatpush2.bf16.msra.mxu0 0
    %1432 = vmatprep.subr.bf16.mxu0 0
    %1433 = vmatpush2.bf16.msra.mxu0 0
    %1434 = vmatprep.subr.bf16.mxu0 0
    %1435 = vmatpush2.bf16.msra.mxu0 0
    %1436 = vmatprep.subr.bf16.mxu0 0
    %1437 = vmatpush2.bf16.msra.mxu0 0
    %1438 = vmatprep.subr.bf16.mxu0 0
    %1439 = vmatpush2.bf16.msra.mxu0 0
    %1440 = vmatprep.subr.bf16.mxu0 0
    %1441 = vmatpush2.bf16.msra.mxu0 0
    %1442 = vmatprep.subr.bf16.mxu0 0
    %1443 = vmatpush2.bf16.msra.mxu0 0
    %1444 = vmatprep.mubr.bf16.mxu0 0
    %1445 = vmatmul.mubr.bf16.gmra.mxu0 %v1340
    %v1446 = vpop.f32.mrf.mxu0
    %v1447 = vadd.f32 %v1362, %v1446
    %v1448 = vpop.f32.mrf.mxu0
    %v1449 = vpop.f32.mrf.mxu0
    %v1450 = vpop.f32.mrf.mxu0
    %1451 = vdwg.mxu0
    %1452 = vst [vmem:[#allocation16] sm:$0xff] %v1447
    // Predicated region
    $region86: #{tpu_custom_call.1} parent=1 // pred_check
      _
    $region87: #{tpu_custom_call.1} parent=1 // pred_check_branch
      %1454 = sbr.rel (0) target = $region89
    $region88: #{tpu_custom_call.1} parent=1 // pred_region
      %s1456 = ssub.s32 128, 128
      %1457 = vsyncadd [#allocation4], %s1456
      %s1459 = sshll.u32 [#allocation16], 4
      %s1460 = int_to_ptr.vmem [resolvable:$true] %s1459
      %1462 = dma.vmem_to_hbm [thread:$0]  %s1460, 128, %s13, [#allocation4]
    $region89: #{tpu_custom_call.1} parent=1 // pred_fallthru
      _
    // Predicated region
    $region90: #{tpu_custom_call.1} parent=1 // pred_check
      _
    $region91: #{tpu_custom_call.1} parent=1 // pred_check_branch
      %1464 = sbr.rel (0) target = $region93
    $region92: #{tpu_custom_call.1} parent=1 // pred_region
      %1465 = dma.done [#allocation4], 128
    $region93: #{tpu_custom_call.1} parent=1 // pred_fallthru
      _
    %1466 = vsyncpa [#allocation3], 1
    %1467 = vsyncpa [#allocation6], 1
    %1468 = vsyncpa [#allocation9], 1
    %1469 = vsyncpa [#allocation12], 1
    %1470 = vsyncpa [#allocation15], 1
    %1471 = vsyncpa [#allocation4], 1

</llo_original>
